<compile_context>
chip_gen: v6e
topology: v6e:2x2x1
jax: 0.10.0
libtpu: 0.0.40
codegen_flags: <defaults>
</compile_context>

<pallas_src>
import functools
import math

import jax
import jax.numpy as jnp
from jax.experimental import pallas as pl
from jax.experimental.pallas import tpu as pltpu


# -----------------------------------------------------------------------------
# In-kernel helpers
# -----------------------------------------------------------------------------
def _gelu_tanh(x):
    # TODO(synk): HF BERT defaults to exact erf-GELU; tanh approx differs ~1e-3.
    c = math.sqrt(2.0 / math.pi)
    return 0.5 * x * (1.0 + jnp.tanh(c * (x + 0.044715 * x * x * x)))


def _layernorm(x, g, b, eps):
    mu = jnp.mean(x, axis=-1, keepdims=True)
    xc = x - mu
    var = jnp.mean(xc * xc, axis=-1, keepdims=True)
    return xc * jax.lax.rsqrt(var + eps) * g + b


# -----------------------------------------------------------------------------
# Fused encoder + masked-mean-pool kernel.
# grid = (num_batch_blocks, num_layers); activations carried in VMEM scratch
# across the layer axis; per-layer weights streamed by the layer grid index.
# -----------------------------------------------------------------------------
def encoder_pool_kernel(emb_ref, mask_k_ref, mask_s_ref,
                        emb_ln_g_ref, emb_ln_b_ref,
                        wqkv_ref, bqkv_ref, wo_ref, bo_ref,
                        ln1_g_ref, ln1_b_ref,
                        w1_ref, b1_ref, w2_ref, b2_ref,
                        ln2_g_ref, ln2_b_ref,
                        out_ref,
                        x_ref,                       # VMEM scratch (Bb*S, H) f32
                        *, num_heads, eps):
    Bb, S, H = emb_ref.shape
    R = Bb * S
    Dh = H // num_heads
    scale = 1.0 / math.sqrt(Dh)
    l = pl.program_id(1)

    # ---- Embedding LayerNorm: first layer step of each batch block only ----
    @pl.when(l == 0)
    def _():
        emb = emb_ref[...].astype(jnp.float32).reshape(R, H)
        x_ref[...] = _layernorm(emb, emb_ln_g_ref[...], emb_ln_b_ref[...], eps)

    x = x_ref[...]                                   # (R, H) f32
    mask_k = mask_k_ref[...]                         # (Bb, 1, S) f32 (0/1)
    bias = (1.0 - mask_k) * -1e9                     # broadcasts over q dim

    # ---- Self-attention: fused QKV over the whole slab ----
    qkv = jnp.dot(x.astype(jnp.bfloat16), wqkv_ref[0],
                  preferred_element_type=jnp.float32) + bqkv_ref[0]   # (R, 3H)
    qkv_bf = qkv.reshape(Bb, S, 3 * H).astype(jnp.bfloat16)           # cast once

    ctx_heads = []
    for h in range(num_heads):                       # tiny static loop over heads
        qh = qkv_bf[:, :, h * Dh:(h + 1) * Dh]                       # (Bb,S,Dh)
        kh = qkv_bf[:, :, H + h * Dh:H + (h + 1) * Dh]
        vh = qkv_bf[:, :, 2 * H + h * Dh:2 * H + (h + 1) * Dh]
        s = jnp.einsum("bqd,bkd->bqk", qh, kh,
                       preferred_element_type=jnp.float32)           # (Bb,S,S)
        s = s * scale + bias
        m = jnp.max(s, axis=-1, keepdims=True)
        p = jnp.exp(s - m)
        p = p * pl.reciprocal(jnp.sum(p, axis=-1, keepdims=True), approx=True)
        ctx_heads.append(jnp.einsum("bqk,bkd->bqd", p.astype(jnp.bfloat16), vh,
                                    preferred_element_type=jnp.float32))
    ctx = jnp.concatenate(ctx_heads, axis=-1).reshape(R, H)          # (R, H) f32

    # Single output projection over the slab (no per-head accumulation).
    attn = jnp.dot(ctx.astype(jnp.bfloat16), wo_ref[0],
                   preferred_element_type=jnp.float32) + bo_ref[0]   # (R, H)

    x = _layernorm(x + attn, ln1_g_ref[0], ln1_b_ref[0], eps)

    # ---- FFN over the slab ----
    h1 = jnp.dot(x.astype(jnp.bfloat16), w1_ref[0],
                 preferred_element_type=jnp.float32) + b1_ref[0]     # (R, I)
    h1 = _gelu_tanh(h1)
    ffn = jnp.dot(h1.astype(jnp.bfloat16), w2_ref[0],
                  preferred_element_type=jnp.float32) + b2_ref[0]    # (R, H)
    x = _layernorm(x + ffn, ln2_g_ref[0], ln2_b_ref[0], eps)
    x_ref[...] = x

    # ---- Masked mean pooling: last layer step only ----
    @pl.when(l == pl.num_programs(1) - 1)
    def _():
        mask_s = mask_s_ref[...]                                     # (Bb, S, 1)
        xb = x.reshape(Bb, S, H)
        num = jnp.sum(xb * mask_s, axis=1, keepdims=True)            # (Bb, 1, H)
        den = jnp.maximum(jnp.sum(mask_s, axis=1, keepdims=True), 1e-9)
        out_ref[...] = num / den


# -----------------------------------------------------------------------------
# Wrapper: grid / BlockSpec construction
# -----------------------------------------------------------------------------
def _pick_batch_block(Bt, S, rows_target=128):
    """Largest divisor of Bt with ~rows_target rows per slab; prefer >=2 steps."""
    bb = max(1, min(Bt, rows_target // max(S, 1)))
    while Bt % bb:
        bb -= 1
    if Bt // bb < 2 and Bt >= 2:          # keep >=2 grid steps for v7x megacore
        bb2 = bb // 2
        while bb2 >= 1 and Bt % bb2:
            bb2 -= 1
        bb = max(bb2, 1)
    return bb


def encode_and_pool(cfg, params, input_ids, attention_mask):
    """Full BERT encoder + masked mean pool as one pallas_call.

    input_ids: (Bt, S) int32, attention_mask: (Bt, S) -> (Bt, H) f32.
    """
    Bt, S = input_ids.shape
    H = cfg["hidden"]
    L = cfg["num_layers"]

    # Embedding gather is data-dependent -> plain-JAX glue feeding the kernel.
    # TODO(synk): token_type embedding hard-coded to type 0 (matches reference
    # call with no token_type_ids).
    emb = (params["word_emb"][input_ids]
           + params["pos_emb"][:S][None, :, :]
           + params["type_emb"][0][None, None, :]).astype(jnp.bfloat16)
    maskf = attention_mask.astype(jnp.float32)
    mask_k = maskf.reshape(Bt, 1, S)   # key-aligned layout (attention bias)
    mask_s = maskf.reshape(Bt, S, 1)   # seq-aligned layout (pooling)

    Bb = _pick_batch_block(Bt, S)
    grid = (Bt // Bb, L)

    layer_weights = (params["wqkv"], params["bqkv"], params["wo"], params["bo"],
                     params["ln1_g"], params["ln1_b"],
                     params["w1"], params["b1"], params["w2"], params["b2"],
                     params["ln2_g"], params["ln2_b"])
    const_weights = (params["emb_ln_g"], params["emb_ln_b"])

    def _layer_spec(arr):
        return pl.BlockSpec((1,) + arr.shape[1:], lambda b, l: (l, 0, 0))

    def _const_spec(arr):
        return pl.BlockSpec(arr.shape, lambda b, l: (0, 0))

    in_specs = ([pl.BlockSpec((Bb, S, H), lambda b, l: (b, 0, 0)),
                 pl.BlockSpec((Bb, 1, S), lambda b, l: (b, 0, 0)),
                 pl.BlockSpec((Bb, S, 1), lambda b, l: (b, 0, 0))]
                + [_const_spec(w) for w in const_weights]
                + [_layer_spec(w) for w in layer_weights])

    # Rough VMEM footprint (double-buffered blocks + scratch) -> explicit limit.
    est = (2 * sum(w.size * w.dtype.itemsize // L for w in layer_weights)
           + 2 * sum(w.size * w.dtype.itemsize for w in const_weights)
           + 2 * (Bb * S * H * 2 + 2 * Bb * S * 4)
           + 2 * Bb * H * 4
           + Bb * S * H * 4)
    vmem_limit = int(min(max(4 * est, 16 * 2 ** 20), 64 * 2 ** 20))

    kernel = functools.partial(encoder_pool_kernel,
                               num_heads=cfg["num_heads"], eps=1e-12)

    pooled = pl.pallas_call(
        kernel,
        out_shape=jax.ShapeDtypeStruct((Bt, 1, H), jnp.float32),
        grid=grid,
        in_specs=in_specs,
        out_specs=pl.BlockSpec((Bb, 1, H), lambda b, l: (b, 0, 0)),
        scratch_shapes=[pltpu.VMEM((Bb * S, H), jnp.float32)],
        compiler_params=pltpu.CompilerParams(
            dimension_semantics=("parallel", "arbitrary"),
            vmem_limit_bytes=vmem_limit),
    )(emb, mask_k, mask_s, *const_weights, *layer_weights)
    return pooled.reshape(Bt, H)


def get_mean_embeddings(cfg, params, input_ids, attention_mask):
    return encode_and_pool(cfg, params, input_ids, attention_mask)


def sccl_bert_forward(cfg, params, input_ids, attention_mask,
                      task_type="virtual"):
    if task_type == "evaluate":
        return get_mean_embeddings(cfg, params, input_ids, attention_mask)
    elif task_type == "virtual":
        B = input_ids.shape[0]
        # Stack both augmented views on the batch axis -> one kernel launch.
        ids = jnp.concatenate([input_ids[:, 0, :], input_ids[:, 1, :]], axis=0)
        msk = jnp.concatenate([attention_mask[:, 0, :],
                               attention_mask[:, 1, :]], axis=0)
        pooled = get_mean_embeddings(cfg, params, ids, msk)      # (2B, H)
        return pooled[:B], pooled[B:]
    elif task_type == "explicit":
        B = input_ids.shape[0]
        ids = jnp.concatenate([input_ids[:, i, :] for i in range(3)], axis=0)
        msk = jnp.concatenate([attention_mask[:, i, :] for i in range(3)],
                              axis=0)
        pooled = get_mean_embeddings(cfg, params, ids, msk)      # (3B, H)
        return pooled[:B], pooled[B:2 * B], pooled[2 * B:]
    else:
        raise Exception("TRANSFORMER ENCODING TYPE ERROR! "
                        "OPTIONS: [EVALUATE, VIRTUAL, EXPLICIT]")


# -----------------------------------------------------------------------------
# Deterministic parameter init (synthetic tiny-BERT + SCCL heads), packed for
# the fused kernel: per-layer weights stacked along a leading layer axis,
# Q/K/V fused into one [H, 3H] matrix, matmul weights stored bf16.
# -----------------------------------------------------------------------------
def init_params(key, vocab=100, hidden=32, n_layers=2, num_heads=2,
                intermediate=128, max_pos=16, n_clusters=4):
    keys = iter(jax.random.split(key, 64))

    def n(shape, s=0.02):
        return s * jax.random.normal(next(keys), shape, jnp.float32)

    L, H, I = n_layers, hidden, intermediate
    params = dict(
        word_emb=n((vocab, H)),
        pos_emb=n((max_pos, H)),
        type_emb=n((2, H)),
        emb_ln_g=jnp.ones((1, H), jnp.float32),
        emb_ln_b=jnp.zeros((1, H), jnp.float32),
        wqkv=n((L, H, 3 * H)).astype(jnp.bfloat16),
        bqkv=jnp.zeros((L, 1, 3 * H), jnp.float32),
        wo=n((L, H, H)).astype(jnp.bfloat16),
        bo=jnp.zeros((L, 1, H), jnp.float32),
        ln1_g=jnp.ones((L, 1, H), jnp.float32),
        ln1_b=jnp.zeros((L, 1, H), jnp.float32),
        w1=n((L, H, I)).astype(jnp.bfloat16),
        b1=jnp.zeros((L, 1, I), jnp.float32),
        w2=n((L, I, H)).astype(jnp.bfloat16),
        b2=jnp.zeros((L, 1, H), jnp.float32),
        ln2_g=jnp.ones((L, 1, H), jnp.float32),
        ln2_b=jnp.zeros((L, 1, H), jnp.float32),
        # SCCL-specific parameters present in __init__ (unused by forward()):
        cluster_centers=n((n_clusters, H), 1.0),
        contrast_w1=n((H, H)), contrast_b1=jnp.zeros((H,), jnp.float32),
        contrast_w2=n((H, 128)), contrast_b2=jnp.zeros((128,), jnp.float32),
    )
    cfg = dict(hidden=H, num_heads=num_heads, num_layers=L, intermediate=I)
    return cfg, params


# -----------------------------------------------------------------------------
if __name__ == "__main__":
    B, V, S = 2, 2, 8          # batch, num augmented views, seq len
    key = jax.random.PRNGKey(0)
    k_par, k_ids = jax.random.split(key)

    cfg, params = init_params(k_par)

    input_ids = jax.random.randint(k_ids, (B, V, S), 0, 100, dtype=jnp.int32)
    attention_mask = jnp.ones((B, V, S), jnp.int32)
    # make one view have padding to exercise masked mean pooling
    attention_mask = attention_mask.at[:, 1, 5:].set(0)

    fwd = jax.jit(functools.partial(sccl_bert_forward, cfg,
                                    task_type="virtual"))
    out1, out2 = fwd(params, input_ids, attention_mask)
    jax.block_until_ready((out1, out2))

    assert out1.shape == (B, cfg["hidden"]) and out2.shape == (B, cfg["hidden"])
    assert bool(jnp.all(jnp.isfinite(out1))) and bool(jnp.all(jnp.isfinite(out2)))
    print("KERNEL_OK")
</pallas_src>

<mosaic_0001>
module attributes {stable_mosaic.version = 11 : i64} {
  func.func @encoder_pool_kernel(%arg0: i32, %arg1: i32, %arg2: memref<2x8x32xbf16, #tpu.memory_space<vmem>>, %arg3: memref<2x1x8xf32, #tpu.memory_space<vmem>>, %arg4: memref<2x8x1xf32, #tpu.memory_space<vmem>>, %arg5: memref<1x32xf32, #tpu.memory_space<vmem>>, %arg6: memref<1x32xf32, #tpu.memory_space<vmem>>, %arg7: memref<1x32x96xbf16, #tpu.memory_space<vmem>>, %arg8: memref<1x1x96xf32, #tpu.memory_space<vmem>>, %arg9: memref<1x32x32xbf16, #tpu.memory_space<vmem>>, %arg10: memref<1x1x32xf32, #tpu.memory_space<vmem>>, %arg11: memref<1x1x32xf32, #tpu.memory_space<vmem>>, %arg12: memref<1x1x32xf32, #tpu.memory_space<vmem>>, %arg13: memref<1x32x128xbf16, #tpu.memory_space<vmem>>, %arg14: memref<1x1x128xf32, #tpu.memory_space<vmem>>, %arg15: memref<1x128x32xbf16, #tpu.memory_space<vmem>>, %arg16: memref<1x1x32xf32, #tpu.memory_space<vmem>>, %arg17: memref<1x1x32xf32, #tpu.memory_space<vmem>>, %arg18: memref<1x1x32xf32, #tpu.memory_space<vmem>>, %arg19: memref<2x1x32xf32, #tpu.memory_space<vmem>>, %arg20: memref<16x32xf32, #tpu.memory_space<vmem>>) attributes {dimension_semantics = [#tpu.dimension_semantics<parallel>, #tpu.dimension_semantics<arbitrary>], iteration_bounds = array<i64: 2, 2>, scalar_prefetch = 0 : i64, scratch_operands = 1 : i64, tpu.core_type = #tpu.core_type<tc>, window_params = [{transform_indices = @transform_0, window_bounds = array<i64: 2, 8, 32>}, {transform_indices = @transform_1, window_bounds = array<i64: 2, 1, 8>}, {transform_indices = @transform_2, window_bounds = array<i64: 2, 8, 1>}, {pipeline_mode = #tpu.pipeline_mode<synchronous>, transform_indices = @transform_3, window_bounds = array<i64: 1, 32>}, {pipeline_mode = #tpu.pipeline_mode<synchronous>, transform_indices = @transform_4, window_bounds = array<i64: 1, 32>}, {transform_indices = @transform_5, window_bounds = array<i64: 1, 32, 96>}, {transform_indices = @transform_6, window_bounds = array<i64: 1, 1, 96>}, {transform_indices = @transform_7, window_bounds = array<i64: 1, 32, 32>}, {transform_indices = @transform_8, window_bounds = array<i64: 1, 1, 32>}, {transform_indices = @transform_9, window_bounds = array<i64: 1, 1, 32>}, {transform_indices = @transform_10, window_bounds = array<i64: 1, 1, 32>}, {transform_indices = @transform_11, window_bounds = array<i64: 1, 32, 128>}, {transform_indices = @transform_12, window_bounds = array<i64: 1, 1, 128>}, {transform_indices = @transform_13, window_bounds = array<i64: 1, 128, 32>}, {transform_indices = @transform_14, window_bounds = array<i64: 1, 1, 32>}, {transform_indices = @transform_15, window_bounds = array<i64: 1, 1, 32>}, {transform_indices = @transform_16, window_bounds = array<i64: 1, 1, 32>}, {transform_indices = @transform_17, window_bounds = array<i64: 2, 1, 32>}]} {
    %c0_i32 = arith.constant 0 : i32
    %0 = arith.cmpi eq, %arg1, %c0_i32 : i32
    %1 = arith.extui %0 : i1 to i32
    %c0_i32_0 = arith.constant 0 : i32
    %2 = arith.cmpi ne, %1, %c0_i32_0 : i32
    scf.if %2 {
      %c0_73 = arith.constant 0 : index
      %c0_74 = arith.constant 0 : index
      %c0_75 = arith.constant 0 : index
      %152 = vector.load %arg2[%c0_73, %c0_74, %c0_75] : memref<2x8x32xbf16, #tpu.memory_space<vmem>>, vector<2x8x32xbf16>
      %153 = arith.extf %152 : vector<2x8x32xbf16> to vector<2x8x32xf32>
      %154 = vector.shape_cast %153 : vector<2x8x32xf32> to vector<16x32xf32>
      %c0_76 = arith.constant 0 : index
      %c0_77 = arith.constant 0 : index
      %155 = vector.load %arg5[%c0_76, %c0_77] : memref<1x32xf32, #tpu.memory_space<vmem>>, vector<1x32xf32>
      %c0_78 = arith.constant 0 : index
      %c0_79 = arith.constant 0 : index
      %156 = vector.load %arg6[%c0_78, %c0_79] : memref<1x32xf32, #tpu.memory_space<vmem>>, vector<1x32xf32>
      %cst_80 = arith.constant dense<0.000000e+00> : vector<16xf32>
      %157 = vector.multi_reduction <add>, %154, %cst_80 [1] : vector<16x32xf32> to vector<16xf32>
      %158 = vector.shape_cast %157 : vector<16xf32> to vector<16x1xf32>
      %cst_81 = arith.constant 3.200000e+01 : f32
      %159 = vector.broadcast %cst_81 : f32 to vector<16x1xf32>
      %160 = arith.divf %158, %159 : vector<16x1xf32>
      %161 = vector.broadcast %160 : vector<16x1xf32> to vector<16x32xf32>
      %162 = arith.subf %154, %161 : vector<16x32xf32>
      %163 = arith.mulf %162, %162 : vector<16x32xf32>
      %cst_82 = arith.constant dense<0.000000e+00> : vector<16xf32>
      %164 = vector.multi_reduction <add>, %163, %cst_82 [1] : vector<16x32xf32> to vector<16xf32>
      %165 = vector.shape_cast %164 : vector<16xf32> to vector<16x1xf32>
      %cst_83 = arith.constant 3.200000e+01 : f32
      %166 = vector.broadcast %cst_83 : f32 to vector<16x1xf32>
      %167 = arith.divf %165, %166 : vector<16x1xf32>
      %cst_84 = arith.constant 9.99999996E-13 : f32
      %168 = vector.broadcast %cst_84 : f32 to vector<16x1xf32>
      %169 = arith.addf %167, %168 : vector<16x1xf32>
      %170 = math.rsqrt %169 : vector<16x1xf32>
      %171 = vector.broadcast %170 : vector<16x1xf32> to vector<16x32xf32>
      %172 = arith.mulf %162, %171 : vector<16x32xf32>
      %173 = vector.broadcast %155 : vector<1x32xf32> to vector<16x32xf32>
      %174 = arith.mulf %172, %173 : vector<16x32xf32>
      %175 = vector.broadcast %156 : vector<1x32xf32> to vector<16x32xf32>
      %176 = arith.addf %174, %175 : vector<16x32xf32>
      %c0_85 = arith.constant 0 : index
      %c0_86 = arith.constant 0 : index
      %177 = vector.load %arg20[%c0_85, %c0_86] : memref<16x32xf32, #tpu.memory_space<vmem>>, vector<16x32xf32>
      tpu.vector_store %arg20[%c0_85, %c0_86], %176 {strides = array<i32>} : memref<16x32xf32, #tpu.memory_space<vmem>>, vector<16x32xf32>,
    } else {
    }
    %c0 = arith.constant 0 : index
    %c0_1 = arith.constant 0 : index
    %3 = vector.load %arg20[%c0, %c0_1] : memref<16x32xf32, #tpu.memory_space<vmem>>, vector<16x32xf32>
    %c0_2 = arith.constant 0 : index
    %c0_3 = arith.constant 0 : index
    %c0_4 = arith.constant 0 : index
    %4 = vector.load %arg3[%c0_2, %c0_3, %c0_4] : memref<2x1x8xf32, #tpu.memory_space<vmem>>, vector<2x1x8xf32>
    %cst = arith.constant 1.000000e+00 : f32
    %5 = vector.broadcast %cst : f32 to vector<2x1x8xf32>
    %6 = arith.subf %5, %4 : vector<2x1x8xf32>
    %cst_5 = arith.constant -1.000000e+09 : f32
    %7 = vector.broadcast %cst_5 : f32 to vector<2x1x8xf32>
    %8 = arith.mulf %6, %7 : vector<2x1x8xf32>
    %9 = arith.truncf %3 : vector<16x32xf32> to vector<16x32xbf16>
    %c0_6 = arith.constant 0 : index
    %c0_7 = arith.constant 0 : index
    %c0_8 = arith.constant 0 : index
    %10 = vector.load %arg7[%c0_6, %c0_7, %c0_8] : memref<1x32x96xbf16, #tpu.memory_space<vmem>>, vector<1x32x96xbf16>
    %11 = vector.shape_cast %10 : vector<1x32x96xbf16> to vector<32x96xbf16>
    %cst_9 = arith.constant dense<0.000000e+00> : vector<16x96xf32>
    %12 = tpu.matmul %9, %11, %cst_9 {dimension_numbers = #tpu.dot_dimension_numbers<[1], [0], [0], [1], [0, 0, 1, 1], [], []>} : vector<16x32xbf16>, vector<32x96xbf16>, vector<16x96xf32> -> vector<16x96xf32>
    %c0_10 = arith.constant 0 : index
    %c0_11 = arith.constant 0 : index
    %c0_12 = arith.constant 0 : index
    %13 = vector.load %arg8[%c0_10, %c0_11, %c0_12] : memref<1x1x96xf32, #tpu.memory_space<vmem>>, vector<1x1x96xf32>
    %14 = vector.shape_cast %13 : vector<1x1x96xf32> to vector<1x96xf32>
    %15 = vector.broadcast %14 : vector<1x96xf32> to vector<16x96xf32>
    %16 = arith.addf %12, %15 : vector<16x96xf32>
    %17 = vector.shape_cast %16 : vector<16x96xf32> to vector<2x8x96xf32>
    %18 = arith.truncf %17 : vector<2x8x96xf32> to vector<2x8x96xbf16>
    %19 = vector.extract_strided_slice %18 {offsets = [0, 0, 0], sizes = [2, 8, 16], strides = [1, 1, 1]} : vector<2x8x96xbf16> to vector<2x8x16xbf16>
    %20 = vector.extract_strided_slice %18 {offsets = [0, 0, 32], sizes = [2, 8, 16], strides = [1, 1, 1]} : vector<2x8x96xbf16> to vector<2x8x16xbf16>
    %21 = vector.extract_strided_slice %18 {offsets = [0, 0, 64], sizes = [2, 8, 16], strides = [1, 1, 1]} : vector<2x8x96xbf16> to vector<2x8x16xbf16>
    "tpu.trace_start"() <{level = 10 : i32, message = "bqd,bkd->bqk"}> : () -> ()
    %cst_13 = arith.constant dense<0.000000e+00> : vector<2x8x8xf32>
    %22 = tpu.matmul %19, %20, %cst_13 {dimension_numbers = #tpu.dot_dimension_numbers<[2], [2], [1], [1], [0, 0, 0, 1, 1, 1], [0], [0]>} : vector<2x8x16xbf16>, vector<2x8x16xbf16>, vector<2x8x8xf32> -> vector<2x8x8xf32>
    "tpu.trace_stop"() : () -> ()
    %cst_14 = arith.constant 2.500000e-01 : f32
    %23 = vector.broadcast %cst_14 : f32 to vector<2x8x8xf32>
    %24 = arith.mulf %22, %23 : vector<2x8x8xf32>
    %25 = vector.broadcast %8 : vector<2x1x8xf32> to vector<2x8x8xf32>
    %26 = arith.addf %24, %25 : vector<2x8x8xf32>
    %cst_15 = arith.constant dense<0xFF800000> : vector<2x8xf32>
    %27 = vector.multi_reduction <maximumf>, %26, %cst_15 [2] : vector<2x8x8xf32> to vector<2x8xf32>
    %28 = vector.shape_cast %27 : vector<2x8xf32> to vector<2x8x1xf32>
    %29 = vector.broadcast %28 : vector<2x8x1xf32> to vector<2x8x8xf32>
    %30 = arith.subf %26, %29 : vector<2x8x8xf32>
    %31 = math.exp %30 : vector<2x8x8xf32>
    %cst_16 = arith.constant dense<0.000000e+00> : vector<2x8xf32>
    %32 = vector.multi_reduction <add>, %31, %cst_16 [2] : vector<2x8x8xf32> to vector<2x8xf32>
    %33 = vector.shape_cast %32 : vector<2x8xf32> to vector<2x8x1xf32>
    %34 = tpu.reciprocal %33 {approx = true} : vector<2x8x1xf32> -> vector<2x8x1xf32>
    %35 = vector.broadcast %34 : vector<2x8x1xf32> to vector<2x8x8xf32>
    %36 = arith.mulf %31, %35 : vector<2x8x8xf32>
    %37 = arith.truncf %36 : vector<2x8x8xf32> to vector<2x8x8xbf16>
    "tpu.trace_start"() <{level = 10 : i32, message = "bqk,bkd->bqd"}> : () -> ()
    %cst_17 = arith.constant dense<0.000000e+00> : vector<2x8x16xf32>
    %38 = tpu.matmul %37, %21, %cst_17 {dimension_numbers = #tpu.dot_dimension_numbers<[2], [1], [1], [2], [0, 0, 0, 1, 1, 2], [0], [0]>} : vector<2x8x8xbf16>, vector<2x8x16xbf16>, vector<2x8x16xf32> -> vector<2x8x16xf32>
    "tpu.trace_stop"() : () -> ()
    %39 = vector.extract_strided_slice %18 {offsets = [0, 0, 16], sizes = [2, 8, 16], strides = [1, 1, 1]} : vector<2x8x96xbf16> to vector<2x8x16xbf16>
    %40 = vector.extract_strided_slice %18 {offsets = [0, 0, 48], sizes = [2, 8, 16], strides = [1, 1, 1]} : vector<2x8x96xbf16> to vector<2x8x16xbf16>
    %41 = vector.extract_strided_slice %18 {offsets = [0, 0, 80], sizes = [2, 8, 16], strides = [1, 1, 1]} : vector<2x8x96xbf16> to vector<2x8x16xbf16>
    "tpu.trace_start"() <{level = 10 : i32, message = "bqd,bkd->bqk"}> : () -> ()
    %cst_18 = arith.constant dense<0.000000e+00> : vector<2x8x8xf32>
    %42 = tpu.matmul %39, %40, %cst_18 {dimension_numbers = #tpu.dot_dimension_numbers<[2], [2], [1], [1], [0, 0, 0, 1, 1, 1], [0], [0]>} : vector<2x8x16xbf16>, vector<2x8x16xbf16>, vector<2x8x8xf32> -> vector<2x8x8xf32>
    "tpu.trace_stop"() : () -> ()
    %cst_19 = arith.constant 2.500000e-01 : f32
    %43 = vector.broadcast %cst_19 : f32 to vector<2x8x8xf32>
    %44 = arith.mulf %42, %43 : vector<2x8x8xf32>
    %45 = vector.broadcast %8 : vector<2x1x8xf32> to vector<2x8x8xf32>
    %46 = arith.addf %44, %45 : vector<2x8x8xf32>
    %cst_20 = arith.constant dense<0xFF800000> : vector<2x8xf32>
    %47 = vector.multi_reduction <maximumf>, %46, %cst_20 [2] : vector<2x8x8xf32> to vector<2x8xf32>
    %48 = vector.shape_cast %47 : vector<2x8xf32> to vector<2x8x1xf32>
    %49 = vector.broadcast %48 : vector<2x8x1xf32> to vector<2x8x8xf32>
    %50 = arith.subf %46, %49 : vector<2x8x8xf32>
    %51 = math.exp %50 : vector<2x8x8xf32>
    %cst_21 = arith.constant dense<0.000000e+00> : vector<2x8xf32>
    %52 = vector.multi_reduction <add>, %51, %cst_21 [2] : vector<2x8x8xf32> to vector<2x8xf32>
    %53 = vector.shape_cast %52 : vector<2x8xf32> to vector<2x8x1xf32>
    %54 = tpu.reciprocal %53 {approx = true} : vector<2x8x1xf32> -> vector<2x8x1xf32>
    %55 = vector.broadcast %54 : vector<2x8x1xf32> to vector<2x8x8xf32>
    %56 = arith.mulf %51, %55 : vector<2x8x8xf32>
    %57 = arith.truncf %56 : vector<2x8x8xf32> to vector<2x8x8xbf16>
    "tpu.trace_start"() <{level = 10 : i32, message = "bqk,bkd->bqd"}> : () -> ()
    %cst_22 = arith.constant dense<0.000000e+00> : vector<2x8x16xf32>
    %58 = tpu.matmul %57, %41, %cst_22 {dimension_numbers = #tpu.dot_dimension_numbers<[2], [1], [1], [2], [0, 0, 0, 1, 1, 2], [0], [0]>} : vector<2x8x8xbf16>, vector<2x8x16xbf16>, vector<2x8x16xf32> -> vector<2x8x16xf32>
    "tpu.trace_stop"() : () -> ()
    %59 = tpu.concatenate %38, %58 in 2 : vector<2x8x16xf32>, vector<2x8x16xf32> -> vector<2x8x32xf32>
    %60 = vector.shape_cast %59 : vector<2x8x32xf32> to vector<16x32xf32>
    %61 = arith.truncf %60 : vector<16x32xf32> to vector<16x32xbf16>
    %c0_23 = arith.constant 0 : index
    %c0_24 = arith.constant 0 : index
    %c0_25 = arith.constant 0 : index
    %62 = vector.load %arg9[%c0_23, %c0_24, %c0_25] : memref<1x32x32xbf16, #tpu.memory_space<vmem>>, vector<1x32x32xbf16>
    %63 = vector.shape_cast %62 : vector<1x32x32xbf16> to vector<32x32xbf16>
    %cst_26 = arith.constant dense<0.000000e+00> : vector<16x32xf32>
    %64 = tpu.matmul %61, %63, %cst_26 {dimension_numbers = #tpu.dot_dimension_numbers<[1], [0], [0], [1], [0, 0, 1, 1], [], []>} : vector<16x32xbf16>, vector<32x32xbf16>, vector<16x32xf32> -> vector<16x32xf32>
    %c0_27 = arith.constant 0 : index
    %c0_28 = arith.constant 0 : index
    %c0_29 = arith.constant 0 : index
    %65 = vector.load %arg10[%c0_27, %c0_28, %c0_29] : memref<1x1x32xf32, #tpu.memory_space<vmem>>, vector<1x1x32xf32>
    %66 = vector.shape_cast %65 : vector<1x1x32xf32> to vector<1x32xf32>
    %67 = vector.broadcast %66 : vector<1x32xf32> to vector<16x32xf32>
    %68 = arith.addf %64, %67 : vector<16x32xf32>
    %69 = arith.addf %3, %68 : vector<16x32xf32>
    %c0_30 = arith.constant 0 : index
    %c0_31 = arith.constant 0 : index
    %c0_32 = arith.constant 0 : index
    %70 = vector.load %arg11[%c0_30, %c0_31, %c0_32] : memref<1x1x32xf32, #tpu.memory_space<vmem>>, vector<1x1x32xf32>
    %71 = vector.shape_cast %70 : vector<1x1x32xf32> to vector<1x32xf32>
    %c0_33 = arith.constant 0 : index
    %c0_34 = arith.constant 0 : index
    %c0_35 = arith.constant 0 : index
    %72 = vector.load %arg12[%c0_33, %c0_34, %c0_35] : memref<1x1x32xf32, #tpu.memory_space<vmem>>, vector<1x1x32xf32>
    %73 = vector.shape_cast %72 : vector<1x1x32xf32> to vector<1x32xf32>
    %cst_36 = arith.constant dense<0.000000e+00> : vector<16xf32>
    %74 = vector.multi_reduction <add>, %69, %cst_36 [1] : vector<16x32xf32> to vector<16xf32>
    %75 = vector.shape_cast %74 : vector<16xf32> to vector<16x1xf32>
    %cst_37 = arith.constant 3.200000e+01 : f32
    %76 = vector.broadcast %cst_37 : f32 to vector<16x1xf32>
    %77 = arith.divf %75, %76 : vector<16x1xf32>
    %78 = vector.broadcast %77 : vector<16x1xf32> to vector<16x32xf32>
    %79 = arith.subf %69, %78 : vector<16x32xf32>
    %80 = arith.mulf %79, %79 : vector<16x32xf32>
    %cst_38 = arith.constant dense<0.000000e+00> : vector<16xf32>
    %81 = vector.multi_reduction <add>, %80, %cst_38 [1] : vector<16x32xf32> to vector<16xf32>
    %82 = vector.shape_cast %81 : vector<16xf32> to vector<16x1xf32>
    %cst_39 = arith.constant 3.200000e+01 : f32
    %83 = vector.broadcast %cst_39 : f32 to vector<16x1xf32>
    %84 = arith.divf %82, %83 : vector<16x1xf32>
    %cst_40 = arith.constant 9.99999996E-13 : f32
    %85 = vector.broadcast %cst_40 : f32 to vector<16x1xf32>
    %86 = arith.addf %84, %85 : vector<16x1xf32>
    %87 = math.rsqrt %86 : vector<16x1xf32>
    %88 = vector.broadcast %87 : vector<16x1xf32> to vector<16x32xf32>
    %89 = arith.mulf %79, %88 : vector<16x32xf32>
    %90 = vector.broadcast %71 : vector<1x32xf32> to vector<16x32xf32>
    %91 = arith.mulf %89, %90 : vector<16x32xf32>
    %92 = vector.broadcast %73 : vector<1x32xf32> to vector<16x32xf32>
    %93 = arith.addf %91, %92 : vector<16x32xf32>
    %94 = arith.truncf %93 : vector<16x32xf32> to vector<16x32xbf16>
    %c0_41 = arith.constant 0 : index
    %c0_42 = arith.constant 0 : index
    %c0_43 = arith.constant 0 : index
    %95 = vector.load %arg13[%c0_41, %c0_42, %c0_43] : memref<1x32x128xbf16, #tpu.memory_space<vmem>>, vector<1x32x128xbf16>
    %96 = vector.shape_cast %95 : vector<1x32x128xbf16> to vector<32x128xbf16>
    %cst_44 = arith.constant dense<0.000000e+00> : vector<16x128xf32>
    %97 = tpu.matmul %94, %96, %cst_44 {dimension_numbers = #tpu.dot_dimension_numbers<[1], [0], [0], [1], [0, 0, 1, 1], [], []>} : vector<16x32xbf16>, vector<32x128xbf16>, vector<16x128xf32> -> vector<16x128xf32>
    %c0_45 = arith.constant 0 : index
    %c0_46 = arith.constant 0 : index
    %c0_47 = arith.constant 0 : index
    %98 = vector.load %arg14[%c0_45, %c0_46, %c0_47] : memref<1x1x128xf32, #tpu.memory_space<vmem>>, vector<1x1x128xf32>
    %99 = vector.shape_cast %98 : vector<1x1x128xf32> to vector<1x128xf32>
    %100 = vector.broadcast %99 : vector<1x128xf32> to vector<16x128xf32>
    %101 = arith.addf %97, %100 : vector<16x128xf32>
    %cst_48 = arith.constant 5.000000e-01 : f32
    %102 = vector.broadcast %cst_48 : f32 to vector<16x128xf32>
    %103 = arith.mulf %102, %101 : vector<16x128xf32>
    %cst_49 = arith.constant 4.471500e-02 : f32
    %104 = vector.broadcast %cst_49 : f32 to vector<16x128xf32>
    %105 = arith.mulf %104, %101 : vector<16x128xf32>
    %106 = arith.mulf %105, %101 : vector<16x128xf32>
    %107 = arith.mulf %106, %101 : vector<16x128xf32>
    %108 = arith.addf %101, %107 : vector<16x128xf32>
    %cst_50 = arith.constant 0.797884583 : f32
    %109 = vector.broadcast %cst_50 : f32 to vector<16x128xf32>
    %110 = arith.mulf %109, %108 : vector<16x128xf32>
    %111 = math.tanh %110 : vector<16x128xf32>
    %cst_51 = arith.constant 1.000000e+00 : f32
    %112 = vector.broadcast %cst_51 : f32 to vector<16x128xf32>
    %113 = arith.addf %112, %111 : vector<16x128xf32>
    %114 = arith.mulf %103, %113 : vector<16x128xf32>
    %115 = arith.truncf %114 : vector<16x128xf32> to vector<16x128xbf16>
    %c0_52 = arith.constant 0 : index
    %c0_53 = arith.constant 0 : index
    %c0_54 = arith.constant 0 : index
    %116 = vector.load %arg15[%c0_52, %c0_53, %c0_54] : memref<1x128x32xbf16, #tpu.memory_space<vmem>>, vector<1x128x32xbf16>
    %117 = vector.shape_cast %116 : vector<1x128x32xbf16> to vector<128x32xbf16>
    %cst_55 = arith.constant dense<0.000000e+00> : vector<16x32xf32>
    %118 = tpu.matmul %115, %117, %cst_55 {dimension_numbers = #tpu.dot_dimension_numbers<[1], [0], [0], [1], [0, 0, 1, 1], [], []>} : vector<16x128xbf16>, vector<128x32xbf16>, vector<16x32xf32> -> vector<16x32xf32>
    %c0_56 = arith.constant 0 : index
    %c0_57 = arith.constant 0 : index
    %c0_58 = arith.constant 0 : index
    %119 = vector.load %arg16[%c0_56, %c0_57, %c0_58] : memref<1x1x32xf32, #tpu.memory_space<vmem>>, vector<1x1x32xf32>
    %120 = vector.shape_cast %119 : vector<1x1x32xf32> to vector<1x32xf32>
    %121 = vector.broadcast %120 : vector<1x32xf32> to vector<16x32xf32>
    %122 = arith.addf %118, %121 : vector<16x32xf32>
    %123 = arith.addf %93, %122 : vector<16x32xf32>
    %c0_59 = arith.constant 0 : index
    %c0_60 = arith.constant 0 : index
    %c0_61 = arith.constant 0 : index
    %124 = vector.load %arg17[%c0_59, %c0_60, %c0_61] : memref<1x1x32xf32, #tpu.memory_space<vmem>>, vector<1x1x32xf32>
    %125 = vector.shape_cast %124 : vector<1x1x32xf32> to vector<1x32xf32>
    %c0_62 = arith.constant 0 : index
    %c0_63 = arith.constant 0 : index
    %c0_64 = arith.constant 0 : index
    %126 = vector.load %arg18[%c0_62, %c0_63, %c0_64] : memref<1x1x32xf32, #tpu.memory_space<vmem>>, vector<1x1x32xf32>
    %127 = vector.shape_cast %126 : vector<1x1x32xf32> to vector<1x32xf32>
    %cst_65 = arith.constant dense<0.000000e+00> : vector<16xf32>
    %128 = vector.multi_reduction <add>, %123, %cst_65 [1] : vector<16x32xf32> to vector<16xf32>
    %129 = vector.shape_cast %128 : vector<16xf32> to vector<16x1xf32>
    %cst_66 = arith.constant 3.200000e+01 : f32
    %130 = vector.broadcast %cst_66 : f32 to vector<16x1xf32>
    %131 = arith.divf %129, %130 : vector<16x1xf32>
    %132 = vector.broadcast %131 : vector<16x1xf32> to vector<16x32xf32>
    %133 = arith.subf %123, %132 : vector<16x32xf32>
    %134 = arith.mulf %133, %133 : vector<16x32xf32>
    %cst_67 = arith.constant dense<0.000000e+00> : vector<16xf32>
    %135 = vector.multi_reduction <add>, %134, %cst_67 [1] : vector<16x32xf32> to vector<16xf32>
    %136 = vector.shape_cast %135 : vector<16xf32> to vector<16x1xf32>
    %cst_68 = arith.constant 3.200000e+01 : f32
    %137 = vector.broadcast %cst_68 : f32 to vector<16x1xf32>
    %138 = arith.divf %136, %137 : vector<16x1xf32>
    %cst_69 = arith.constant 9.99999996E-13 : f32
    %139 = vector.broadcast %cst_69 : f32 to vector<16x1xf32>
    %140 = arith.addf %138, %139 : vector<16x1xf32>
    %141 = math.rsqrt %140 : vector<16x1xf32>
    %142 = vector.broadcast %141 : vector<16x1xf32> to vector<16x32xf32>
    %143 = arith.mulf %133, %142 : vector<16x32xf32>
    %144 = vector.broadcast %125 : vector<1x32xf32> to vector<16x32xf32>
    %145 = arith.mulf %143, %144 : vector<16x32xf32>
    %146 = vector.broadcast %127 : vector<1x32xf32> to vector<16x32xf32>
    %147 = arith.addf %145, %146 : vector<16x32xf32>
    %c0_70 = arith.constant 0 : index
    %c0_71 = arith.constant 0 : index
    %148 = vector.load %arg20[%c0_70, %c0_71] : memref<16x32xf32, #tpu.memory_space<vmem>>, vector<16x32xf32>
    tpu.vector_store %arg20[%c0_70, %c0_71], %147 {strides = array<i32>} : memref<16x32xf32, #tpu.memory_space<vmem>>, vector<16x32xf32>,
    %c1_i32 = arith.constant 1 : i32
    %149 = arith.cmpi eq, %arg1, %c1_i32 : i32
    %150 = arith.extui %149 : i1 to i32
    %c0_i32_72 = arith.constant 0 : i32
    %151 = arith.cmpi ne, %150, %c0_i32_72 : i32
    scf.if %151 {
      %c0_73 = arith.constant 0 : index
      %c0_74 = arith.constant 0 : index
      %c0_75 = arith.constant 0 : index
      %152 = vector.load %arg4[%c0_73, %c0_74, %c0_75] : memref<2x8x1xf32, #tpu.memory_space<vmem>>, vector<2x8x1xf32>
      %153 = vector.shape_cast %147 : vector<16x32xf32> to vector<2x8x32xf32>
      %154 = vector.broadcast %152 : vector<2x8x1xf32> to vector<2x8x32xf32>
      %155 = arith.mulf %153, %154 : vector<2x8x32xf32>
      %cst_76 = arith.constant dense<0.000000e+00> : vector<2x32xf32>
      %156 = vector.multi_reduction <add>, %155, %cst_76 [1] : vector<2x8x32xf32> to vector<2x32xf32>
      %157 = vector.shape_cast %156 : vector<2x32xf32> to vector<2x1x32xf32>
      %cst_77 = arith.constant dense<0.000000e+00> : vector<2x1xf32>
      %158 = vector.multi_reduction <add>, %152, %cst_77 [1] : vector<2x8x1xf32> to vector<2x1xf32>
      %159 = vector.shape_cast %158 : vector<2x1xf32> to vector<2x1x1xf32>
      %cst_78 = arith.constant 9.99999971E-10 : f32
      %160 = vector.broadcast %cst_78 : f32 to vector<2x1x1xf32>
      %161 = arith.maximumf %159, %160 : vector<2x1x1xf32>
      %162 = vector.broadcast %161 : vector<2x1x1xf32> to vector<2x1x32xf32>
      %163 = arith.divf %157, %162 : vector<2x1x32xf32>
      %c0_79 = arith.constant 0 : index
      %c0_80 = arith.constant 0 : index
      %c0_81 = arith.constant 0 : index
      %164 = vector.load %arg19[%c0_79, %c0_80, %c0_81] : memref<2x1x32xf32, #tpu.memory_space<vmem>>, vector<2x1x32xf32>
      tpu.vector_store %arg19[%c0_79, %c0_80, %c0_81], %163 {strides = array<i32>} : memref<2x1x32xf32, #tpu.memory_space<vmem>>, vector<2x1x32xf32>,
    } else {
    }
    return
  }
  func.func @transform_0(%arg0: i32, %arg1: i32) -> (i32, i32, i32) {
    %c0_i32 = arith.constant 0 : i32
    %c0_i32_0 = arith.constant 0 : i32
    %c0_i32_1 = arith.constant 0 : i32
    return %arg0, %c0_i32, %c0_i32_0 : i32, i32, i32
  }
  func.func @transform_1(%arg0: i32, %arg1: i32) -> (i32, i32, i32) {
    %c0_i32 = arith.constant 0 : i32
    %c0_i32_0 = arith.constant 0 : i32
    %c0_i32_1 = arith.constant 0 : i32
    return %arg0, %c0_i32, %c0_i32_0 : i32, i32, i32
  }
  func.func @transform_2(%arg0: i32, %arg1: i32) -> (i32, i32, i32) {
    %c0_i32 = arith.constant 0 : i32
    %c0_i32_0 = arith.constant 0 : i32
    %c0_i32_1 = arith.constant 0 : i32
    return %arg0, %c0_i32, %c0_i32_0 : i32, i32, i32
  }
  func.func @transform_3(%arg0: i32, %arg1: i32) -> (i32, i32) {
    %c0_i32 = arith.constant 0 : i32
    %c0_i32_0 = arith.constant 0 : i32
    %c0_i32_1 = arith.constant 0 : i32
    return %c0_i32, %c0_i32_0 : i32, i32
  }
  func.func @transform_4(%arg0: i32, %arg1: i32) -> (i32, i32) {
    %c0_i32 = arith.constant 0 : i32
    %c0_i32_0 = arith.constant 0 : i32
    %c0_i32_1 = arith.constant 0 : i32
    return %c0_i32, %c0_i32_0 : i32, i32
  }
  func.func @transform_5(%arg0: i32, %arg1: i32) -> (i32, i32, i32) {
    %c0_i32 = arith.constant 0 : i32
    %c0_i32_0 = arith.constant 0 : i32
    %c0_i32_1 = arith.constant 0 : i32
    return %arg1, %c0_i32, %c0_i32_0 : i32, i32, i32
  }
  func.func @transform_6(%arg0: i32, %arg1: i32) -> (i32, i32, i32) {
    %c0_i32 = arith.constant 0 : i32
    %c0_i32_0 = arith.constant 0 : i32
    %c0_i32_1 = arith.constant 0 : i32
    return %arg1, %c0_i32, %c0_i32_0 : i32, i32, i32
  }
  func.func @transform_7(%arg0: i32, %arg1: i32) -> (i32, i32, i32) {
    %c0_i32 = arith.constant 0 : i32
    %c0_i32_0 = arith.constant 0 : i32
    %c0_i32_1 = arith.constant 0 : i32
    return %arg1, %c0_i32, %c0_i32_0 : i32, i32, i32
  }
  func.func @transform_8(%arg0: i32, %arg1: i32) -> (i32, i32, i32) {
    %c0_i32 = arith.constant 0 : i32
    %c0_i32_0 = arith.constant 0 : i32
    %c0_i32_1 = arith.constant 0 : i32
    return %arg1, %c0_i32, %c0_i32_0 : i32, i32, i32
  }
  func.func @transform_9(%arg0: i32, %arg1: i32) -> (i32, i32, i32) {
    %c0_i32 = arith.constant 0 : i32
    %c0_i32_0 = arith.constant 0 : i32
    %c0_i32_1 = arith.constant 0 : i32
    return %arg1, %c0_i32, %c0_i32_0 : i32, i32, i32
  }
  func.func @transform_10(%arg0: i32, %arg1: i32) -> (i32, i32, i32) {
    %c0_i32 = arith.constant 0 : i32
    %c0_i32_0 = arith.constant 0 : i32
    %c0_i32_1 = arith.constant 0 : i32
    return %arg1, %c0_i32, %c0_i32_0 : i32, i32, i32
  }
  func.func @transform_11(%arg0: i32, %arg1: i32) -> (i32, i32, i32) {
    %c0_i32 = arith.constant 0 : i32
    %c0_i32_0 = arith.constant 0 : i32
    %c0_i32_1 = arith.constant 0 : i32
    return %arg1, %c0_i32, %c0_i32_0 : i32, i32, i32
  }
  func.func @transform_12(%arg0: i32, %arg1: i32) -> (i32, i32, i32) {
    %c0_i32 = arith.constant 0 : i32
    %c0_i32_0 = arith.constant 0 : i32
    %c0_i32_1 = arith.constant 0 : i32
    return %arg1, %c0_i32, %c0_i32_0 : i32, i32, i32
  }
  func.func @transform_13(%arg0: i32, %arg1: i32) -> (i32, i32, i32) {
    %c0_i32 = arith.constant 0 : i32
    %c0_i32_0 = arith.constant 0 : i32
    %c0_i32_1 = arith.constant 0 : i32
    return %arg1, %c0_i32, %c0_i32_0 : i32, i32, i32
  }
  func.func @transform_14(%arg0: i32, %arg1: i32) -> (i32, i32, i32) {
    %c0_i32 = arith.constant 0 : i32
    %c0_i32_0 = arith.constant 0 : i32
    %c0_i32_1 = arith.constant 0 : i32
    return %arg1, %c0_i32, %c0_i32_0 : i32, i32, i32
  }
  func.func @transform_15(%arg0: i32, %arg1: i32) -> (i32, i32, i32) {
    %c0_i32 = arith.constant 0 : i32
    %c0_i32_0 = arith.constant 0 : i32
    %c0_i32_1 = arith.constant 0 : i32
    return %arg1, %c0_i32, %c0_i32_0 : i32, i32, i32
  }
  func.func @transform_16(%arg0: i32, %arg1: i32) -> (i32, i32, i32) {
    %c0_i32 = arith.constant 0 : i32
    %c0_i32_0 = arith.constant 0 : i32
    %c0_i32_1 = arith.constant 0 : i32
    return %arg1, %c0_i32, %c0_i32_0 : i32, i32, i32
  }
  func.func @transform_17(%arg0: i32, %arg1: i32) -> (i32, i32, i32) {
    %c0_i32 = arith.constant 0 : i32
    %c0_i32_0 = arith.constant 0 : i32
    %c0_i32_1 = arith.constant 0 : i32
    return %arg0, %c0_i32, %c0_i32_0 : i32, i32, i32
  }
}

</mosaic_0001>

<llo_original>
// kernel: sccl_bert_forward.1
$region0: #{sccl_bert_forward.1}
  #allocation0 [shape = 'u32[]', space=smem, size = 0x4, offset = 0x4, fixed_abs, tag = 'smem constant byte address 0x4 - core index']
  #allocation1 [shape = 'u32[144,128]{1,0:T(1,128)}', space=vmem, size = 0x12000, scoped, tag = 'internal scratch']
  #allocation2 [shape = 'f32[16,32]{1,0:T(8,128)}', space=vmem, size = 0x2000, scoped, tag = 'scratch operand']
  %s0 = inlined_call_operand.vmem [shape: bf16[4,8,32], index: 0, kind: input, shape index: {}]
  %s1 = inlined_call_operand.vmem [shape: f32[4,1,8], index: 1, kind: input, shape index: {}]
  %s2 = inlined_call_operand.vmem [shape: f32[4,8,1], index: 2, kind: input, shape index: {}]
  %s3 = inlined_call_operand.vmem [shape: f32[1,32], index: 3, kind: input, shape index: {}]
  %s4 = inlined_call_operand.vmem [shape: f32[1,32], index: 4, kind: input, shape index: {}]
  %s5 = inlined_call_operand.vmem [shape: bf16[2,32,96], index: 5, kind: input, shape index: {}]
  %s6 = inlined_call_operand.vmem [shape: f32[2,1,96], index: 6, kind: input, shape index: {}]
  %s7 = inlined_call_operand.vmem [shape: bf16[2,32,32], index: 7, kind: input, shape index: {}]
  %s8 = inlined_call_operand.vmem [shape: f32[2,1,32], index: 8, kind: input, shape index: {}]
  %s9 = inlined_call_operand.vmem [shape: f32[2,1,32], index: 9, kind: input, shape index: {}]
  %s10 = inlined_call_operand.vmem [shape: f32[2,1,32], index: 10, kind: input, shape index: {}]
  %s11 = inlined_call_operand.vmem [shape: bf16[2,32,128], index: 11, kind: input, shape index: {}]
  %s12 = inlined_call_operand.vmem [shape: f32[2,1,128], index: 12, kind: input, shape index: {}]
  %s13 = inlined_call_operand.vmem [shape: bf16[2,128,32], index: 13, kind: input, shape index: {}]
  %s14 = inlined_call_operand.vmem [shape: f32[2,1,32], index: 14, kind: input, shape index: {}]
  %s15 = inlined_call_operand.vmem [shape: f32[2,1,32], index: 15, kind: input, shape index: {}]
  %s16 = inlined_call_operand.vmem [shape: f32[2,1,32], index: 16, kind: input, shape index: {}]
  %s17 = inlined_call_operand.vmem [shape: f32[4,1,32], index: 17, kind: output, shape index: {}]
  %s18 = sld [smem:[#allocation0]]
  $region109: #{sccl_bert_forward.1} parent=0
    _
  %s20 = ssub.s32 1, %s18
  %s21 = scalar_select 0, %s20, %s18
  loop: start=0, step=1, limit=6
  $region2: #{sccl_bert_forward.1} parent=0 // loop_pre_header
    _
  $region3: #{sccl_bert_forward.1} parent=0 // loop_header
    %s23 = sphi 0, %s27
    %p24 = scmp.ge.s32.totalorder %s23, 6
    %s30 = sphi 0, %s42
    %s31 = sphi 0, %s38
    %s32 = sphi 0, %s30
    %s33 = sphi 0, %s31
    %s34 = sphi 0, %s32
    %s35 = sphi 0, %s33
    %s45 = sphi 0, %s47
    %s48 = sphi 0, %s45
    %s49 = sphi 0, %s48
    %s65 = sphi 0, %s49
    %s71 = sphi 0, %s73
    %s74 = sphi 0, %s71
    %s75 = sphi 0, %s74
    %s91 = sphi 0, %s75
    %s97 = sphi 0, %s99
    %s100 = sphi 0, %s97
    %s101 = sphi 0, %s100
    %s117 = sphi 0, %s101
    %s121 = sphi 0, %s121
    %s123 = sphi 0, %s121
    %s124 = sphi 0, %s123
    %s138 = sphi 0, %s124
    %s142 = sphi 0, %s142
    %s144 = sphi 0, %s142
    %s145 = sphi 0, %s144
    %s159 = sphi 0, %s145
    %s165 = sphi 0, %s167
    %s168 = sphi 0, %s165
    %s169 = sphi 0, %s168
    %s185 = sphi 0, %s169
    %s191 = sphi 0, %s193
    %s194 = sphi 0, %s191
    %s195 = sphi 0, %s194
    %s211 = sphi 0, %s195
    %s217 = sphi 0, %s219
    %s220 = sphi 0, %s217
    %s221 = sphi 0, %s220
    %s237 = sphi 0, %s221
    %s243 = sphi 0, %s245
    %s246 = sphi 0, %s243
    %s247 = sphi 0, %s246
    %s263 = sphi 0, %s247
    %s269 = sphi 0, %s271
    %s272 = sphi 0, %s269
    %s273 = sphi 0, %s272
    %s289 = sphi 0, %s273
    %s295 = sphi 0, %s297
    %s298 = sphi 0, %s295
    %s299 = sphi 0, %s298
    %s315 = sphi 0, %s299
    %s321 = sphi 0, %s323
    %s324 = sphi 0, %s321
    %s325 = sphi 0, %s324
    %s341 = sphi 0, %s325
    %s347 = sphi 0, %s349
    %s350 = sphi 0, %s347
    %s351 = sphi 0, %s350
    %s367 = sphi 0, %s351
    %s373 = sphi 0, %s375
    %s376 = sphi 0, %s373
    %s377 = sphi 0, %s376
    %s393 = sphi 0, %s377
    %s399 = sphi 0, %s401
    %s402 = sphi 0, %s399
    %s403 = sphi 0, %s402
    %s419 = sphi 0, %s403
    %s425 = sphi 0, %s427
    %s428 = sphi 0, %s425
    %s429 = sphi 0, %s428
    %s445 = sphi 0, %s429
    %s451 = sphi 0, %s453
    %s454 = sphi 0, %s451
    %s455 = sphi 0, %s454
    %s471 = sphi 0, %s455
    %s477 = sphi 0, %s479
    %s480 = sphi 0, %s477
    %s481 = sphi 0, %s480
    %s497 = sphi 0, %s481
  $region4: #{sccl_bert_forward.1} parent=0 // loop_header_branch
    %26 = sbr.rel (%p24) target = $region8
  $region5: #{sccl_bert_forward.1} parent=0 // loop_body
    %s28 = ssub.s32 %s23, 1
    %s29 = ssub.s32 %s23, 2
    %s36 = sadd.s32 1, %s31
    %p37 = scmp.ge.s32.totalorder %s36, 2
    %s38 = scalar_select %p37, 0, %s36
    %s39 = sadd.s32 1, %s30
    %s40 = scalar_select %p37, %s39, %s30
    %p41 = scmp.ge.s32.totalorder %s40, 2
    %s42 = scalar_select %p41, 0, %s40
    %s43 = ssub.s32 %s30, %s42
    %p44 = scmp.eq.s32.totalorder %s43, 0
    %s46 = sadd.s32 %s45, 1
    %s47 = scalar_select %p44, %s45, %s46
    %p50 = pneg %p44
    %p51 = scmp.eq.s32.totalorder %s23, 3
    %p52 = por %p50, %p51
    %p53 = scmp.ne.s32.totalorder %s45, %s48
    %p54 = scmp.eq.s32.totalorder %s23, 0
    %p55 = por %p53, %p54
    %p56 = scmp.ne.s32.totalorder %s45, %s48
    %p57 = scmp.eq.s32.totalorder %s28, 3
    %p58 = por %p56, %p57
    %p59 = scmp.ne.s32.totalorder %s48, %s49
    %p60 = scmp.eq.s32.totalorder %s28, 0
    %p61 = por %p59, %p60
    %p62 = scmp.ne.s32.totalorder %s48, %s49
    %p63 = scmp.eq.s32.totalorder %s29, 3
    %p64 = por %p62, %p63
    %p66 = scmp.ne.s32.totalorder %s49, %s65
    %p67 = scmp.eq.s32.totalorder %s29, 0
    %p68 = por %p66, %p67
    %s69 = ssub.s32 %s30, %s42
    %p70 = scmp.eq.s32.totalorder %s69, 0
    %s72 = sadd.s32 %s71, 1
    %s73 = scalar_select %p70, %s71, %s72
    %p76 = pneg %p70
    %p77 = scmp.eq.s32.totalorder %s23, 3
    %p78 = por %p76, %p77
    %p79 = scmp.ne.s32.totalorder %s71, %s74
    %p80 = scmp.eq.s32.totalorder %s23, 0
    %p81 = por %p79, %p80
    %p82 = scmp.ne.s32.totalorder %s71, %s74
    %p83 = scmp.eq.s32.totalorder %s28, 3
    %p84 = por %p82, %p83
    %p85 = scmp.ne.s32.totalorder %s74, %s75
    %p86 = scmp.eq.s32.totalorder %s28, 0
    %p87 = por %p85, %p86
    %p88 = scmp.ne.s32.totalorder %s74, %s75
    %p89 = scmp.eq.s32.totalorder %s29, 3
    %p90 = por %p88, %p89
    %p92 = scmp.ne.s32.totalorder %s75, %s91
    %p93 = scmp.eq.s32.totalorder %s29, 0
    %p94 = por %p92, %p93
    %s95 = ssub.s32 %s30, %s42
    %p96 = scmp.eq.s32.totalorder %s95, 0
    %s98 = sadd.s32 %s97, 1
    %s99 = scalar_select %p96, %s97, %s98
    %p102 = pneg %p96
    %p103 = scmp.eq.s32.totalorder %s23, 3
    %p104 = por %p102, %p103
    %p105 = scmp.ne.s32.totalorder %s97, %s100
    %p106 = scmp.eq.s32.totalorder %s23, 0
    %p107 = por %p105, %p106
    %p108 = scmp.ne.s32.totalorder %s97, %s100
    %p109 = scmp.eq.s32.totalorder %s28, 3
    %p110 = por %p108, %p109
    %p111 = scmp.ne.s32.totalorder %s100, %s101
    %p112 = scmp.eq.s32.totalorder %s28, 0
    %p113 = por %p111, %p112
    %p114 = scmp.ne.s32.totalorder %s100, %s101
    %p115 = scmp.eq.s32.totalorder %s29, 3
    %p116 = por %p114, %p115
    %p118 = scmp.ne.s32.totalorder %s101, %s117
    %p119 = scmp.eq.s32.totalorder %s29, 0
    %p120 = por %p118, %p119
    %s122 = sadd.s32 %s121, 1
    %p125 = scmp.eq.s32.totalorder %s23, 3
    %p126 = scmp.ne.s32.totalorder %s121, %s123
    %p127 = scmp.eq.s32.totalorder %s23, 0
    %p128 = por %p126, %p127
    %p129 = scmp.ne.s32.totalorder %s121, %s123
    %p130 = scmp.eq.s32.totalorder %s28, 3
    %p131 = por %p129, %p130
    %p132 = scmp.ne.s32.totalorder %s123, %s124
    %p133 = scmp.eq.s32.totalorder %s28, 0
    %p134 = por %p132, %p133
    %p135 = scmp.ne.s32.totalorder %s123, %s124
    %p136 = scmp.eq.s32.totalorder %s29, 3
    %p137 = por %p135, %p136
    %p139 = scmp.ne.s32.totalorder %s124, %s138
    %p140 = scmp.eq.s32.totalorder %s29, 0
    %p141 = por %p139, %p140
    %s143 = sadd.s32 %s142, 1
    %p146 = scmp.eq.s32.totalorder %s23, 3
    %p147 = scmp.ne.s32.totalorder %s142, %s144
    %p148 = scmp.eq.s32.totalorder %s23, 0
    %p149 = por %p147, %p148
    %p150 = scmp.ne.s32.totalorder %s142, %s144
    %p151 = scmp.eq.s32.totalorder %s28, 3
    %p152 = por %p150, %p151
    %p153 = scmp.ne.s32.totalorder %s144, %s145
    %p154 = scmp.eq.s32.totalorder %s28, 0
    %p155 = por %p153, %p154
    %p156 = scmp.ne.s32.totalorder %s144, %s145
    %p157 = scmp.eq.s32.totalorder %s29, 3
    %p158 = por %p156, %p157
    %p160 = scmp.ne.s32.totalorder %s145, %s159
    %p161 = scmp.eq.s32.totalorder %s29, 0
    %p162 = por %p160, %p161
    %s163 = ssub.s32 %s31, %s38
    %p164 = scmp.eq.s32.totalorder %s163, 0
    %s166 = sadd.s32 %s165, 1
    %s167 = scalar_select %p164, %s165, %s166
    %p170 = pneg %p164
    %p171 = scmp.eq.s32.totalorder %s23, 3
    %p172 = por %p170, %p171
    %p173 = scmp.ne.s32.totalorder %s165, %s168
    %p174 = scmp.eq.s32.totalorder %s23, 0
    %p175 = por %p173, %p174
    %p176 = scmp.ne.s32.totalorder %s165, %s168
    %p177 = scmp.eq.s32.totalorder %s28, 3
    %p178 = por %p176, %p177
    %p179 = scmp.ne.s32.totalorder %s168, %s169
    %p180 = scmp.eq.s32.totalorder %s28, 0
    %p181 = por %p179, %p180
    %p182 = scmp.ne.s32.totalorder %s168, %s169
    %p183 = scmp.eq.s32.totalorder %s29, 3
    %p184 = por %p182, %p183
    %p186 = scmp.ne.s32.totalorder %s169, %s185
    %p187 = scmp.eq.s32.totalorder %s29, 0
    %p188 = por %p186, %p187
    %s189 = ssub.s32 %s31, %s38
    %p190 = scmp.eq.s32.totalorder %s189, 0
    %s192 = sadd.s32 %s191, 1
    %s193 = scalar_select %p190, %s191, %s192
    %p196 = pneg %p190
    %p197 = scmp.eq.s32.totalorder %s23, 3
    %p198 = por %p196, %p197
    %p199 = scmp.ne.s32.totalorder %s191, %s194
    %p200 = scmp.eq.s32.totalorder %s23, 0
    %p201 = por %p199, %p200
    %p202 = scmp.ne.s32.totalorder %s191, %s194
    %p203 = scmp.eq.s32.totalorder %s28, 3
    %p204 = por %p202, %p203
    %p205 = scmp.ne.s32.totalorder %s194, %s195
    %p206 = scmp.eq.s32.totalorder %s28, 0
    %p207 = por %p205, %p206
    %p208 = scmp.ne.s32.totalorder %s194, %s195
    %p209 = scmp.eq.s32.totalorder %s29, 3
    %p210 = por %p208, %p209
    %p212 = scmp.ne.s32.totalorder %s195, %s211
    %p213 = scmp.eq.s32.totalorder %s29, 0
    %p214 = por %p212, %p213
    %s215 = ssub.s32 %s31, %s38
    %p216 = scmp.eq.s32.totalorder %s215, 0
    %s218 = sadd.s32 %s217, 1
    %s219 = scalar_select %p216, %s217, %s218
    %p222 = pneg %p216
    %p223 = scmp.eq.s32.totalorder %s23, 3
    %p224 = por %p222, %p223
    %p225 = scmp.ne.s32.totalorder %s217, %s220
    %p226 = scmp.eq.s32.totalorder %s23, 0
    %p227 = por %p225, %p226
    %p228 = scmp.ne.s32.totalorder %s217, %s220
    %p229 = scmp.eq.s32.totalorder %s28, 3
    %p230 = por %p228, %p229
    %p231 = scmp.ne.s32.totalorder %s220, %s221
    %p232 = scmp.eq.s32.totalorder %s28, 0
    %p233 = por %p231, %p232
    %p234 = scmp.ne.s32.totalorder %s220, %s221
    %p235 = scmp.eq.s32.totalorder %s29, 3
    %p236 = por %p234, %p235
    %p238 = scmp.ne.s32.totalorder %s221, %s237
    %p239 = scmp.eq.s32.totalorder %s29, 0
    %p240 = por %p238, %p239
    %s241 = ssub.s32 %s31, %s38
    %p242 = scmp.eq.s32.totalorder %s241, 0
    %s244 = sadd.s32 %s243, 1
    %s245 = scalar_select %p242, %s243, %s244
    %p248 = pneg %p242
    %p249 = scmp.eq.s32.totalorder %s23, 3
    %p250 = por %p248, %p249
    %p251 = scmp.ne.s32.totalorder %s243, %s246
    %p252 = scmp.eq.s32.totalorder %s23, 0
    %p253 = por %p251, %p252
    %p254 = scmp.ne.s32.totalorder %s243, %s246
    %p255 = scmp.eq.s32.totalorder %s28, 3
    %p256 = por %p254, %p255
    %p257 = scmp.ne.s32.totalorder %s246, %s247
    %p258 = scmp.eq.s32.totalorder %s28, 0
    %p259 = por %p257, %p258
    %p260 = scmp.ne.s32.totalorder %s246, %s247
    %p261 = scmp.eq.s32.totalorder %s29, 3
    %p262 = por %p260, %p261
    %p264 = scmp.ne.s32.totalorder %s247, %s263
    %p265 = scmp.eq.s32.totalorder %s29, 0
    %p266 = por %p264, %p265
    %s267 = ssub.s32 %s31, %s38
    %p268 = scmp.eq.s32.totalorder %s267, 0
    %s270 = sadd.s32 %s269, 1
    %s271 = scalar_select %p268, %s269, %s270
    %p274 = pneg %p268
    %p275 = scmp.eq.s32.totalorder %s23, 3
    %p276 = por %p274, %p275
    %p277 = scmp.ne.s32.totalorder %s269, %s272
    %p278 = scmp.eq.s32.totalorder %s23, 0
    %p279 = por %p277, %p278
    %p280 = scmp.ne.s32.totalorder %s269, %s272
    %p281 = scmp.eq.s32.totalorder %s28, 3
    %p282 = por %p280, %p281
    %p283 = scmp.ne.s32.totalorder %s272, %s273
    %p284 = scmp.eq.s32.totalorder %s28, 0
    %p285 = por %p283, %p284
    %p286 = scmp.ne.s32.totalorder %s272, %s273
    %p287 = scmp.eq.s32.totalorder %s29, 3
    %p288 = por %p286, %p287
    %p290 = scmp.ne.s32.totalorder %s273, %s289
    %p291 = scmp.eq.s32.totalorder %s29, 0
    %p292 = por %p290, %p291
    %s293 = ssub.s32 %s31, %s38
    %p294 = scmp.eq.s32.totalorder %s293, 0
    %s296 = sadd.s32 %s295, 1
    %s297 = scalar_select %p294, %s295, %s296
    %p300 = pneg %p294
    %p301 = scmp.eq.s32.totalorder %s23, 3
    %p302 = por %p300, %p301
    %p303 = scmp.ne.s32.totalorder %s295, %s298
    %p304 = scmp.eq.s32.totalorder %s23, 0
    %p305 = por %p303, %p304
    %p306 = scmp.ne.s32.totalorder %s295, %s298
    %p307 = scmp.eq.s32.totalorder %s28, 3
    %p308 = por %p306, %p307
    %p309 = scmp.ne.s32.totalorder %s298, %s299
    %p310 = scmp.eq.s32.totalorder %s28, 0
    %p311 = por %p309, %p310
    %p312 = scmp.ne.s32.totalorder %s298, %s299
    %p313 = scmp.eq.s32.totalorder %s29, 3
    %p314 = por %p312, %p313
    %p316 = scmp.ne.s32.totalorder %s299, %s315
    %p317 = scmp.eq.s32.totalorder %s29, 0
    %p318 = por %p316, %p317
    %s319 = ssub.s32 %s31, %s38
    %p320 = scmp.eq.s32.totalorder %s319, 0
    %s322 = sadd.s32 %s321, 1
    %s323 = scalar_select %p320, %s321, %s322
    %p326 = pneg %p320
    %p327 = scmp.eq.s32.totalorder %s23, 3
    %p328 = por %p326, %p327
    %p329 = scmp.ne.s32.totalorder %s321, %s324
    %p330 = scmp.eq.s32.totalorder %s23, 0
    %p331 = por %p329, %p330
    %p332 = scmp.ne.s32.totalorder %s321, %s324
    %p333 = scmp.eq.s32.totalorder %s28, 3
    %p334 = por %p332, %p333
    %p335 = scmp.ne.s32.totalorder %s324, %s325
    %p336 = scmp.eq.s32.totalorder %s28, 0
    %p337 = por %p335, %p336
    %p338 = scmp.ne.s32.totalorder %s324, %s325
    %p339 = scmp.eq.s32.totalorder %s29, 3
    %p340 = por %p338, %p339
    %p342 = scmp.ne.s32.totalorder %s325, %s341
    %p343 = scmp.eq.s32.totalorder %s29, 0
    %p344 = por %p342, %p343
    %s345 = ssub.s32 %s31, %s38
    %p346 = scmp.eq.s32.totalorder %s345, 0
    %s348 = sadd.s32 %s347, 1
    %s349 = scalar_select %p346, %s347, %s348
    %p352 = pneg %p346
    %p353 = scmp.eq.s32.totalorder %s23, 3
    %p354 = por %p352, %p353
    %p355 = scmp.ne.s32.totalorder %s347, %s350
    %p356 = scmp.eq.s32.totalorder %s23, 0
    %p357 = por %p355, %p356
    %p358 = scmp.ne.s32.totalorder %s347, %s350
    %p359 = scmp.eq.s32.totalorder %s28, 3
    %p360 = por %p358, %p359
    %p361 = scmp.ne.s32.totalorder %s350, %s351
    %p362 = scmp.eq.s32.totalorder %s28, 0
    %p363 = por %p361, %p362
    %p364 = scmp.ne.s32.totalorder %s350, %s351
    %p365 = scmp.eq.s32.totalorder %s29, 3
    %p366 = por %p364, %p365
    %p368 = scmp.ne.s32.totalorder %s351, %s367
    %p369 = scmp.eq.s32.totalorder %s29, 0
    %p370 = por %p368, %p369
    %s371 = ssub.s32 %s31, %s38
    %p372 = scmp.eq.s32.totalorder %s371, 0
    %s374 = sadd.s32 %s373, 1
    %s375 = scalar_select %p372, %s373, %s374
    %p378 = pneg %p372
    %p379 = scmp.eq.s32.totalorder %s23, 3
    %p380 = por %p378, %p379
    %p381 = scmp.ne.s32.totalorder %s373, %s376
    %p382 = scmp.eq.s32.totalorder %s23, 0
    %p383 = por %p381, %p382
    %p384 = scmp.ne.s32.totalorder %s373, %s376
    %p385 = scmp.eq.s32.totalorder %s28, 3
    %p386 = por %p384, %p385
    %p387 = scmp.ne.s32.totalorder %s376, %s377
    %p388 = scmp.eq.s32.totalorder %s28, 0
    %p389 = por %p387, %p388
    %p390 = scmp.ne.s32.totalorder %s376, %s377
    %p391 = scmp.eq.s32.totalorder %s29, 3
    %p392 = por %p390, %p391
    %p394 = scmp.ne.s32.totalorder %s377, %s393
    %p395 = scmp.eq.s32.totalorder %s29, 0
    %p396 = por %p394, %p395
    %s397 = ssub.s32 %s31, %s38
    %p398 = scmp.eq.s32.totalorder %s397, 0
    %s400 = sadd.s32 %s399, 1
    %s401 = scalar_select %p398, %s399, %s400
    %p404 = pneg %p398
    %p405 = scmp.eq.s32.totalorder %s23, 3
    %p406 = por %p404, %p405
    %p407 = scmp.ne.s32.totalorder %s399, %s402
    %p408 = scmp.eq.s32.totalorder %s23, 0
    %p409 = por %p407, %p408
    %p410 = scmp.ne.s32.totalorder %s399, %s402
    %p411 = scmp.eq.s32.totalorder %s28, 3
    %p412 = por %p410, %p411
    %p413 = scmp.ne.s32.totalorder %s402, %s403
    %p414 = scmp.eq.s32.totalorder %s28, 0
    %p415 = por %p413, %p414
    %p416 = scmp.ne.s32.totalorder %s402, %s403
    %p417 = scmp.eq.s32.totalorder %s29, 3
    %p418 = por %p416, %p417
    %p420 = scmp.ne.s32.totalorder %s403, %s419
    %p421 = scmp.eq.s32.totalorder %s29, 0
    %p422 = por %p420, %p421
    %s423 = ssub.s32 %s31, %s38
    %p424 = scmp.eq.s32.totalorder %s423, 0
    %s426 = sadd.s32 %s425, 1
    %s427 = scalar_select %p424, %s425, %s426
    %p430 = pneg %p424
    %p431 = scmp.eq.s32.totalorder %s23, 3
    %p432 = por %p430, %p431
    %p433 = scmp.ne.s32.totalorder %s425, %s428
    %p434 = scmp.eq.s32.totalorder %s23, 0
    %p435 = por %p433, %p434
    %p436 = scmp.ne.s32.totalorder %s425, %s428
    %p437 = scmp.eq.s32.totalorder %s28, 3
    %p438 = por %p436, %p437
    %p439 = scmp.ne.s32.totalorder %s428, %s429
    %p440 = scmp.eq.s32.totalorder %s28, 0
    %p441 = por %p439, %p440
    %p442 = scmp.ne.s32.totalorder %s428, %s429
    %p443 = scmp.eq.s32.totalorder %s29, 3
    %p444 = por %p442, %p443
    %p446 = scmp.ne.s32.totalorder %s429, %s445
    %p447 = scmp.eq.s32.totalorder %s29, 0
    %p448 = por %p446, %p447
    %s449 = ssub.s32 %s31, %s38
    %p450 = scmp.eq.s32.totalorder %s449, 0
    %s452 = sadd.s32 %s451, 1
    %s453 = scalar_select %p450, %s451, %s452
    %p456 = pneg %p450
    %p457 = scmp.eq.s32.totalorder %s23, 3
    %p458 = por %p456, %p457
    %p459 = scmp.ne.s32.totalorder %s451, %s454
    %p460 = scmp.eq.s32.totalorder %s23, 0
    %p461 = por %p459, %p460
    %p462 = scmp.ne.s32.totalorder %s451, %s454
    %p463 = scmp.eq.s32.totalorder %s28, 3
    %p464 = por %p462, %p463
    %p465 = scmp.ne.s32.totalorder %s454, %s455
    %p466 = scmp.eq.s32.totalorder %s28, 0
    %p467 = por %p465, %p466
    %p468 = scmp.ne.s32.totalorder %s454, %s455
    %p469 = scmp.eq.s32.totalorder %s29, 3
    %p470 = por %p468, %p469
    %p472 = scmp.ne.s32.totalorder %s455, %s471
    %p473 = scmp.eq.s32.totalorder %s29, 0
    %p474 = por %p472, %p473
    %s475 = ssub.s32 %s30, %s42
    %p476 = scmp.eq.s32.totalorder %s475, 0
    %s478 = sadd.s32 %s477, 1
    %s479 = scalar_select %p476, %s477, %s478
    %p482 = pneg %p476
    %p483 = scmp.eq.s32.totalorder %s23, 3
    %p484 = por %p482, %p483
    %p485 = scmp.ne.s32.totalorder %s477, %s480
    %p486 = scmp.eq.s32.totalorder %s23, 0
    %p487 = por %p485, %p486
    %p488 = scmp.ne.s32.totalorder %s477, %s480
    %p489 = scmp.eq.s32.totalorder %s28, 3
    %p490 = por %p488, %p489
    %p491 = scmp.ne.s32.totalorder %s480, %s481
    %p492 = scmp.eq.s32.totalorder %s28, 0
    %p493 = por %p491, %p492
    %p494 = scmp.ne.s32.totalorder %s480, %s481
    %p495 = scmp.eq.s32.totalorder %s29, 3
    %p496 = por %p494, %p495
    %p498 = scmp.ne.s32.totalorder %s481, %s497
    %p499 = scmp.eq.s32.totalorder %s29, 0
    %p500 = por %p498, %p499
    %p501 = scmp.le.s32.totalorder 1, %s23
    %p502 = scmp.lt.s32.totalorder %s23, 5
    %p503 = pnand %p501, %p502
    %p504 = pneg %p503
    // Predicated region
    $region9: #{sccl_bert_forward.1} parent=5 // pred_check
      _
    $region10: #{sccl_bert_forward.1} parent=5 // pred_check_branch
      %506 = sbr.rel (%p503) target = $region12
    $region11: #{sccl_bert_forward.1} parent=5 // pred_region
      %s507 = ssub.s32 %s23, 1
      // Predicated region
      $region13: #{sccl_bert_forward.1} parent=11 // pred_check
        %p508 = pneg %p134
      $region14: #{sccl_bert_forward.1} parent=11 // pred_check_branch
        %510 = sbr.rel (%p508) target = $region16
      $region15: #{sccl_bert_forward.1} parent=11 // pred_region
        _
      $region16: #{sccl_bert_forward.1} parent=11 // pred_fallthru
        _
      // Predicated region
      $region17: #{sccl_bert_forward.1} parent=11 // pred_check
        %p511 = pneg %p155
      $region18: #{sccl_bert_forward.1} parent=11 // pred_check_branch
        %513 = sbr.rel (%p511) target = $region20
      $region19: #{sccl_bert_forward.1} parent=11 // pred_region
        _
      $region20: #{sccl_bert_forward.1} parent=11 // pred_fallthru
        _
    $region12: #{sccl_bert_forward.1} parent=5 // pred_fallthru
      _
    %p514 = scmp.lt.s32.totalorder %s23, 4
    // Predicated region
    $region21: #{sccl_bert_forward.1} parent=5 // pred_check
      %p515 = pneg %p514
    $region22: #{sccl_bert_forward.1} parent=5 // pred_check_branch
      %517 = sbr.rel (%p515) target = $region24
    $region23: #{sccl_bert_forward.1} parent=5 // pred_region
      // Predicated region
      $region25: #{sccl_bert_forward.1} parent=23 // pred_check
        %p518 = pneg %p55
      $region26: #{sccl_bert_forward.1} parent=23 // pred_check_branch
        %520 = sbr.rel (%p518) target = $region28
      $region27: #{sccl_bert_forward.1} parent=23 // pred_region
        %s521 = smul.u32 2, %s30
        %p522 = scmp.lt.s32.totalorder %s521, 3
        %s523 = scalar_select %p522, %s521, 3
        %s524 = smul.addr %s523, 4
        %s525 = scalar_lea.vmem %s0, %s524
        %s526 = smul.u32 2, %s30
      $region28: #{sccl_bert_forward.1} parent=23 // pred_fallthru
        _
      // Predicated region
      $region29: #{sccl_bert_forward.1} parent=23 // pred_check
        %p527 = pneg %p81
      $region30: #{sccl_bert_forward.1} parent=23 // pred_check_branch
        %529 = sbr.rel (%p527) target = $region32
      $region31: #{sccl_bert_forward.1} parent=23 // pred_region
        %s530 = smul.u32 2, %s30
        %p531 = scmp.lt.s32.totalorder %s530, 3
        %s532 = scalar_select %p531, %s530, 3
        %s533 = scalar_lea.vmem %s1, %s532
        %s534 = smul.u32 2, %s30
      $region32: #{sccl_bert_forward.1} parent=23 // pred_fallthru
        _
      // Predicated region
      $region33: #{sccl_bert_forward.1} parent=23 // pred_check
        %p535 = pneg %p107
      $region34: #{sccl_bert_forward.1} parent=23 // pred_check_branch
        %537 = sbr.rel (%p535) target = $region36
      $region35: #{sccl_bert_forward.1} parent=23 // pred_region
        %s538 = smul.u32 2, %s30
        %p539 = scmp.lt.s32.totalorder %s538, 3
        %s540 = scalar_select %p539, %s538, 3
        %s541 = smul.addr %s540, 8
        %s542 = scalar_lea.vmem %s2, %s541
        %s543 = smul.u32 2, %s30
      $region36: #{sccl_bert_forward.1} parent=23 // pred_fallthru
        _
      // Predicated region
      $region37: #{sccl_bert_forward.1} parent=23 // pred_check
        %p544 = pneg %p175
      $region38: #{sccl_bert_forward.1} parent=23 // pred_check_branch
        %546 = sbr.rel (%p544) target = $region40
      $region39: #{sccl_bert_forward.1} parent=23 // pred_region
        %p547 = scmp.lt.s32.totalorder %s31, 1
        %s548 = scalar_select %p547, %s31, 1
        %s549 = smul.addr %s548, 4
        %s550 = smul.addr %s549, 4
        %s551 = scalar_lea.vmem %s5, %s550
      $region40: #{sccl_bert_forward.1} parent=23 // pred_fallthru
        _
      // Predicated region
      $region41: #{sccl_bert_forward.1} parent=23 // pred_check
        %p552 = pneg %p201
      $region42: #{sccl_bert_forward.1} parent=23 // pred_check_branch
        %554 = sbr.rel (%p552) target = $region44
      $region43: #{sccl_bert_forward.1} parent=23 // pred_region
        %p555 = scmp.lt.s32.totalorder %s31, 1
        %s556 = scalar_select %p555, %s31, 1
        %s557 = scalar_lea.vmem %s6, %s556
      $region44: #{sccl_bert_forward.1} parent=23 // pred_fallthru
        _
      // Predicated region
      $region45: #{sccl_bert_forward.1} parent=23 // pred_check
        %p558 = pneg %p227
      $region46: #{sccl_bert_forward.1} parent=23 // pred_check_branch
        %560 = sbr.rel (%p558) target = $region48
      $region47: #{sccl_bert_forward.1} parent=23 // pred_region
        %p561 = scmp.lt.s32.totalorder %s31, 1
        %s562 = scalar_select %p561, %s31, 1
        %s563 = smul.addr %s562, 4
        %s564 = smul.addr %s563, 4
        %s565 = scalar_lea.vmem %s7, %s564
      $region48: #{sccl_bert_forward.1} parent=23 // pred_fallthru
        _
      // Predicated region
      $region49: #{sccl_bert_forward.1} parent=23 // pred_check
        %p566 = pneg %p253
      $region50: #{sccl_bert_forward.1} parent=23 // pred_check_branch
        %568 = sbr.rel (%p566) target = $region52
      $region51: #{sccl_bert_forward.1} parent=23 // pred_region
        %p569 = scmp.lt.s32.totalorder %s31, 1
        %s570 = scalar_select %p569, %s31, 1
        %s571 = scalar_lea.vmem %s8, %s570
      $region52: #{sccl_bert_forward.1} parent=23 // pred_fallthru
        _
      // Predicated region
      $region53: #{sccl_bert_forward.1} parent=23 // pred_check
        %p572 = pneg %p279
      $region54: #{sccl_bert_forward.1} parent=23 // pred_check_branch
        %574 = sbr.rel (%p572) target = $region56
      $region55: #{sccl_bert_forward.1} parent=23 // pred_region
        %p575 = scmp.lt.s32.totalorder %s31, 1
        %s576 = scalar_select %p575, %s31, 1
        %s577 = scalar_lea.vmem %s9, %s576
      $region56: #{sccl_bert_forward.1} parent=23 // pred_fallthru
        _
      // Predicated region
      $region57: #{sccl_bert_forward.1} parent=23 // pred_check
        %p578 = pneg %p305
      $region58: #{sccl_bert_forward.1} parent=23 // pred_check_branch
        %580 = sbr.rel (%p578) target = $region60
      $region59: #{sccl_bert_forward.1} parent=23 // pred_region
        %p581 = scmp.lt.s32.totalorder %s31, 1
        %s582 = scalar_select %p581, %s31, 1
        %s583 = scalar_lea.vmem %s10, %s582
      $region60: #{sccl_bert_forward.1} parent=23 // pred_fallthru
        _
      // Predicated region
      $region61: #{sccl_bert_forward.1} parent=23 // pred_check
        %p584 = pneg %p331
      $region62: #{sccl_bert_forward.1} parent=23 // pred_check_branch
        %586 = sbr.rel (%p584) target = $region64
      $region63: #{sccl_bert_forward.1} parent=23 // pred_region
        %p587 = scmp.lt.s32.totalorder %s31, 1
        %s588 = scalar_select %p587, %s31, 1
        %s589 = smul.addr %s588, 4
        %s590 = smul.addr %s589, 4
        %s591 = scalar_lea.vmem %s11, %s590
      $region64: #{sccl_bert_forward.1} parent=23 // pred_fallthru
        _
      // Predicated region
      $region65: #{sccl_bert_forward.1} parent=23 // pred_check
        %p592 = pneg %p357
      $region66: #{sccl_bert_forward.1} parent=23 // pred_check_branch
        %594 = sbr.rel (%p592) target = $region68
      $region67: #{sccl_bert_forward.1} parent=23 // pred_region
        %p595 = scmp.lt.s32.totalorder %s31, 1
        %s596 = scalar_select %p595, %s31, 1
        %s597 = scalar_lea.vmem %s12, %s596
      $region68: #{sccl_bert_forward.1} parent=23 // pred_fallthru
        _
      // Predicated region
      $region69: #{sccl_bert_forward.1} parent=23 // pred_check
        %p598 = pneg %p383
      $region70: #{sccl_bert_forward.1} parent=23 // pred_check_branch
        %600 = sbr.rel (%p598) target = $region72
      $region71: #{sccl_bert_forward.1} parent=23 // pred_region
        %p601 = scmp.lt.s32.totalorder %s31, 1
        %s602 = scalar_select %p601, %s31, 1
        %s603 = smul.addr %s602, 16
        %s604 = smul.addr %s603, 4
        %s605 = scalar_lea.vmem %s13, %s604
      $region72: #{sccl_bert_forward.1} parent=23 // pred_fallthru
        _
      // Predicated region
      $region73: #{sccl_bert_forward.1} parent=23 // pred_check
        %p606 = pneg %p409
      $region74: #{sccl_bert_forward.1} parent=23 // pred_check_branch
        %608 = sbr.rel (%p606) target = $region76
      $region75: #{sccl_bert_forward.1} parent=23 // pred_region
        %p609 = scmp.lt.s32.totalorder %s31, 1
        %s610 = scalar_select %p609, %s31, 1
        %s611 = scalar_lea.vmem %s14, %s610
      $region76: #{sccl_bert_forward.1} parent=23 // pred_fallthru
        _
      // Predicated region
      $region77: #{sccl_bert_forward.1} parent=23 // pred_check
        %p612 = pneg %p435
      $region78: #{sccl_bert_forward.1} parent=23 // pred_check_branch
        %614 = sbr.rel (%p612) target = $region80
      $region79: #{sccl_bert_forward.1} parent=23 // pred_region
        %p615 = scmp.lt.s32.totalorder %s31, 1
        %s616 = scalar_select %p615, %s31, 1
        %s617 = scalar_lea.vmem %s15, %s616
      $region80: #{sccl_bert_forward.1} parent=23 // pred_fallthru
        _
      // Predicated region
      $region81: #{sccl_bert_forward.1} parent=23 // pred_check
        %p618 = pneg %p461
      $region82: #{sccl_bert_forward.1} parent=23 // pred_check_branch
        %620 = sbr.rel (%p618) target = $region84
      $region83: #{sccl_bert_forward.1} parent=23 // pred_region
        %p621 = scmp.lt.s32.totalorder %s31, 1
        %s622 = scalar_select %p621, %s31, 1
        %s623 = scalar_lea.vmem %s16, %s622
      $region84: #{sccl_bert_forward.1} parent=23 // pred_fallthru
        _
    $region24: #{sccl_bert_forward.1} parent=5 // pred_fallthru
      _
    %p624 = scmp.le.s32.totalorder 1, %s23
    %p625 = scmp.lt.s32.totalorder %s23, 5
    %p626 = pnand %p624, %p625
    %p627 = pneg %p626
    // Predicated region
    $region85: #{sccl_bert_forward.1} parent=5 // pred_check
      _
    $region86: #{sccl_bert_forward.1} parent=5 // pred_check_branch
      %629 = sbr.rel (%p626) target = $region88
    $region87: #{sccl_bert_forward.1} parent=5 // pred_region
      %s630 = ssub.s32 %s23, 1
      %s631 = smul.u32 2, %s32
      %p632 = scmp.lt.s32.totalorder %s631, 3
      %s633 = scalar_select %p632, %s631, 3
      %s634 = smul.addr %s633, 4
      %s635 = scalar_lea.vmem %s0, %s634
      %p636 = pneg %p61
      %p637 = pneg %p58
      %s638 = smul.u32 2, %s32
      %p639 = scmp.lt.s32.totalorder %s638, 3
      %s640 = scalar_select %p639, %s638, 3
      %s641 = scalar_lea.vmem %s1, %s640
      %p642 = pneg %p87
      %p643 = pneg %p84
      %s644 = smul.u32 2, %s32
      %p645 = scmp.lt.s32.totalorder %s644, 3
      %s646 = scalar_select %p645, %s644, 3
      %s647 = smul.addr %s646, 8
      %s648 = scalar_lea.vmem %s2, %s647
      %p649 = pneg %p113
      %p650 = pneg %p110
      %p651 = pneg %p134
      %p652 = pneg %p131
      %p653 = pneg %p155
      %p654 = pneg %p152
      %p655 = scmp.lt.s32.totalorder %s33, 1
      %s656 = scalar_select %p655, %s33, 1
      %s657 = smul.addr %s656, 4
      %s658 = smul.addr %s657, 4
      %s659 = scalar_lea.vmem %s5, %s658
      %p660 = pneg %p181
      %p661 = pneg %p178
      %p662 = scmp.lt.s32.totalorder %s33, 1
      %s663 = scalar_select %p662, %s33, 1
      %s664 = scalar_lea.vmem %s6, %s663
      %p665 = pneg %p207
      %p666 = pneg %p204
      %p667 = scmp.lt.s32.totalorder %s33, 1
      %s668 = scalar_select %p667, %s33, 1
      %s669 = smul.addr %s668, 4
      %s670 = smul.addr %s669, 4
      %s671 = scalar_lea.vmem %s7, %s670
      %p672 = pneg %p233
      %p673 = pneg %p230
      %p674 = scmp.lt.s32.totalorder %s33, 1
      %s675 = scalar_select %p674, %s33, 1
      %s676 = scalar_lea.vmem %s8, %s675
      %p677 = pneg %p259
      %p678 = pneg %p256
      %p679 = scmp.lt.s32.totalorder %s33, 1
      %s680 = scalar_select %p679, %s33, 1
      %s681 = scalar_lea.vmem %s9, %s680
      %p682 = pneg %p285
      %p683 = pneg %p282
      %p684 = scmp.lt.s32.totalorder %s33, 1
      %s685 = scalar_select %p684, %s33, 1
      %s686 = scalar_lea.vmem %s10, %s685
      %p687 = pneg %p311
      %p688 = pneg %p308
      %p689 = scmp.lt.s32.totalorder %s33, 1
      %s690 = scalar_select %p689, %s33, 1
      %s691 = smul.addr %s690, 4
      %s692 = smul.addr %s691, 4
      %s693 = scalar_lea.vmem %s11, %s692
      %p694 = pneg %p337
      %p695 = pneg %p334
      %p696 = scmp.lt.s32.totalorder %s33, 1
      %s697 = scalar_select %p696, %s33, 1
      %s698 = scalar_lea.vmem %s12, %s697
      %p699 = pneg %p363
      %p700 = pneg %p360
      %p701 = scmp.lt.s32.totalorder %s33, 1
      %s702 = scalar_select %p701, %s33, 1
      %s703 = smul.addr %s702, 16
      %s704 = smul.addr %s703, 4
      %s705 = scalar_lea.vmem %s13, %s704
      %p706 = pneg %p389
      %p707 = pneg %p386
      %p708 = scmp.lt.s32.totalorder %s33, 1
      %s709 = scalar_select %p708, %s33, 1
      %s710 = scalar_lea.vmem %s14, %s709
      %p711 = pneg %p415
      %p712 = pneg %p412
      %p713 = scmp.lt.s32.totalorder %s33, 1
      %s714 = scalar_select %p713, %s33, 1
      %s715 = scalar_lea.vmem %s15, %s714
      %p716 = pneg %p441
      %p717 = pneg %p438
      %p718 = scmp.lt.s32.totalorder %s33, 1
      %s719 = scalar_select %p718, %s33, 1
      %s720 = scalar_lea.vmem %s16, %s719
      %p721 = pneg %p467
      %p722 = pneg %p464
      %p723 = pneg %p493
      %p724 = pneg %p490
      %s725 = smul.u32 2, %s32
      %p726 = scmp.lt.s32.totalorder %s725, 3
      %s727 = scalar_select %p726, %s725, 3
      %s728 = scalar_lea.vmem %s17, %s727
      %s729 = smul.u32 2, %s32
      %p730 = scmp.lt.s32.totalorder %s729, 3
      %s731 = scalar_select %p730, %s729, 3
      %s732 = smul.addr %s731, 4
      %s733 = scalar_lea.vmem %s0, %s732
      %s734 = smul.u32 2, %s32
      %s735 = smul.u32 2, %s32
      %p736 = scmp.lt.s32.totalorder %s735, 3
      %s737 = scalar_select %p736, %s735, 3
      %s738 = scalar_lea.vmem %s1, %s737
      %s739 = smul.u32 2, %s32
      %s740 = smul.u32 2, %s32
      %p741 = scmp.lt.s32.totalorder %s740, 3
      %s742 = scalar_select %p741, %s740, 3
      %s743 = smul.addr %s742, 8
      %s744 = scalar_lea.vmem %s2, %s743
      %s745 = smul.u32 2, %s32
      %p746 = scmp.lt.s32.totalorder %s33, 1
      %s747 = scalar_select %p746, %s33, 1
      %s748 = smul.addr %s747, 4
      %s749 = smul.addr %s748, 4
      %s750 = scalar_lea.vmem %s5, %s749
      %p751 = scmp.lt.s32.totalorder %s33, 1
      %s752 = scalar_select %p751, %s33, 1
      %s753 = scalar_lea.vmem %s6, %s752
      %p754 = scmp.lt.s32.totalorder %s33, 1
      %s755 = scalar_select %p754, %s33, 1
      %s756 = smul.addr %s755, 4
      %s757 = smul.addr %s756, 4
      %s758 = scalar_lea.vmem %s7, %s757
      %p759 = scmp.lt.s32.totalorder %s33, 1
      %s760 = scalar_select %p759, %s33, 1
      %s761 = scalar_lea.vmem %s8, %s760
      %p762 = scmp.lt.s32.totalorder %s33, 1
      %s763 = scalar_select %p762, %s33, 1
      %s764 = scalar_lea.vmem %s9, %s763
      %p765 = scmp.lt.s32.totalorder %s33, 1
      %s766 = scalar_select %p765, %s33, 1
      %s767 = scalar_lea.vmem %s10, %s766
      %p768 = scmp.lt.s32.totalorder %s33, 1
      %s769 = scalar_select %p768, %s33, 1
      %s770 = smul.addr %s769, 4
      %s771 = smul.addr %s770, 4
      %s772 = scalar_lea.vmem %s11, %s771
      %p773 = scmp.lt.s32.totalorder %s33, 1
      %s774 = scalar_select %p773, %s33, 1
      %s775 = scalar_lea.vmem %s12, %s774
      %p776 = scmp.lt.s32.totalorder %s33, 1
      %s777 = scalar_select %p776, %s33, 1
      %s778 = smul.addr %s777, 16
      %s779 = smul.addr %s778, 4
      %s780 = scalar_lea.vmem %s13, %s779
      %p781 = scmp.lt.s32.totalorder %s33, 1
      %s782 = scalar_select %p781, %s33, 1
      %s783 = scalar_lea.vmem %s14, %s782
      %p784 = scmp.lt.s32.totalorder %s33, 1
      %s785 = scalar_select %p784, %s33, 1
      %s786 = scalar_lea.vmem %s15, %s785
      %p787 = scmp.lt.s32.totalorder %s33, 1
      %s788 = scalar_select %p787, %s33, 1
      %s789 = scalar_lea.vmem %s16, %s788
      %s790 = smul.u32 2, %s32
      %p791 = scmp.lt.s32.totalorder %s790, 3
      %s792 = scalar_select %p791, %s790, 3
      %s793 = scalar_lea.vmem %s17, %s792
      %s794 = smul.u32 2, %s32
      %p796 = scmp.eq.s32.totalorder %s33, 0
      // Predicated region
      $region89: #{sccl_bert_forward.1} parent=87 // pred_check
        %p797 = pneg %p796
      $region90: #{sccl_bert_forward.1} parent=87 // pred_check_branch
        %799 = sbr.rel (%p797) target = $region92
      $region91: #{sccl_bert_forward.1} parent=87 // pred_region
        %v800 = vld [vmem:[%s733] sm:$0xf]
        %v801 = vld [vmem:[%s733 + $0x4] sm:$0xf]
        %v802 = vunpack.c.l.bf16 %v800
        %v803 = vunpack.c.l.bf16 %v801
        %v804 = vld [vmem:[%s3] sm:$0x1]
        %v805 = vld [vmem:[%s4] sm:$0x1]
        %vm806 = vcmask 261120
        %v807 = vsel %vm806, %v802, 0.0
        %808 = vadd.xlane.f32.xlu0 %v807
        %v809 = vpop.xlane.xlu0 %808
        %v810 = vsel %vm806, %v803, 0.0
        %811 = vadd.xlane.f32.xlu0 %v810
        %v812 = vpop.xlane.xlu0 %811
        %v813 = vrcp.pop 32.0
        %v814 = vmul.f32 %v809, %v813
        %v815 = vmul.f32 %v812, %v813
        %v816 = vsub.f32 %v802, %v814
        %v817 = vsub.f32 %v803, %v815
        %v818 = vmul.f32 %v816, %v816
        %v819 = vmul.f32 %v817, %v817
        %v820 = vsel %vm806, %v818, 0.0
        %821 = vadd.xlane.f32.xlu0 %v820
        %v822 = vpop.xlane.xlu0 %821
        %v823 = vsel %vm806, %v819, 0.0
        %824 = vadd.xlane.f32.xlu0 %v823
        %v825 = vpop.xlane.xlu0 %824
        %v826 = vmul.f32 %v822, %v813
        %v827 = vmul.f32 %v825, %v813
        %v828 = vadd.f32 %v826, 1e-12
        %v829 = vadd.f32 %v827, 1e-12
        %v830 = vrsqrt.pop %v828
        %v831 = vrsqrt.pop %v829
        %v832 = vmul.f32 %v816, %v830
        %v833 = vmul.f32 %v817, %v831
        %v835 = vlaneseq
        %v836 = vshrl.u32 %v835, 7
        %v837 = vsub.s32 0, %v836
        %v838 = vrot.slane %v804, %v837
        %v840 = vmul.f32 %v832, %v838
        %v841 = vmul.f32 %v833, %v838
        %v843 = vlaneseq
        %v844 = vshrl.u32 %v843, 7
        %v845 = vsub.s32 0, %v844
        %v846 = vrot.slane %v805, %v845
        %v848 = vadd.f32 %v840, %v846
        %v849 = vadd.f32 %v841, %v846
        %850 = vst.msk [vmem:[#allocation2] sm:$0xff] %vm806, %v848
        %851 = vst.msk [vmem:[#allocation2 + $0x8] sm:$0xff] %vm806, %v849
      $region92: #{sccl_bert_forward.1} parent=87 // pred_fallthru
        _
      %v852 = vld [vmem:[#allocation2] sm:$0xff]
      %v853 = vld [vmem:[#allocation2 + $0x8] sm:$0xff]
      %v854 = vld [vmem:[%s738] sm:$0x1]
      %v855 = vld [vmem:[%s738 + $0x1] sm:$0x1]
      %v856 = vsub.f32 1.0, %v854
      %v857 = vsub.f32 1.0, %v855
      %v858 = vmul.f32 %v856, -1e+09
      %v859 = vmul.f32 %v857, -1e+09
      %v860 = vpack.c.bf16 %v853, %v852
      %v861 = vld [vmem:[%s750] sm:$0xf]
      %v862 = vld [vmem:[%s750 + $0x4] sm:$0xf]
      %v863 = vld [vmem:[%s750 + $0x8] sm:$0xf]
      %v864 = vld [vmem:[%s750 + $0xc] sm:$0xf]
      %v865 = vld [vmem:[%s753] sm:$0x1]
      %v867 = vlaneseq
      %v868 = vshrl.u32 %v867, 7
      %v869 = vsub.s32 0, %v868
      %v870 = vrot.slane %v865, %v869
      %v876 = vunpack.c.l.b16 %v861
      %v877 = vunpack.c.l.b16 %v862
      %v878 = vunpack.c.l.b16 %v863
      %v879 = vunpack.c.l.b16 %v864
      %v880 = vpack.c.b16 %v877, %v876
      %v881 = vpack.c.b16 %v879, %v878
      %vm884 = vcmask 261120
      %v886 = vsel %vm884, %v860, 0
      %888 = vmatprep.subr.bf16.mxu0 0
      %889 = vmatpush1.bf16.msra.mxu0 0
      %890 = vmatprep.subr.bf16.mxu0 0
      %891 = vmatpush1.bf16.msra.mxu0 0
      %892 = vmatprep.subr.bf16.mxu0 0
      %893 = vmatpush1.bf16.msra.mxu0 0
      %894 = vmatprep.subr.bf16.mxu0 0
      %895 = vmatpush1.bf16.msra.mxu0 0
      %896 = vmatprep.subr.bf16.mxu0 0
      %897 = vmatpush1.bf16.msra.mxu0 0
      %898 = vmatprep.subr.bf16.mxu0 0
      %899 = vmatpush1.bf16.msra.mxu0 0
      %900 = vmatprep.subr.bf16.mxu0 0
      %901 = vmatpush1.bf16.msra.mxu0 %v881
      %902 = vmatprep.subr.bf16.mxu0 0
      %903 = vmatpush1.bf16.msra.mxu0 %v880
      %904 = vmatprep.subr.bf16.mxu0 0
      %905 = vmatpush2.bf16.msra.mxu0 0
      %906 = vmatprep.subr.bf16.mxu0 0
      %907 = vmatpush2.bf16.msra.mxu0 0
      %908 = vmatprep.subr.bf16.mxu0 0
      %909 = vmatpush2.bf16.msra.mxu0 0
      %910 = vmatprep.subr.bf16.mxu0 0
      %911 = vmatpush2.bf16.msra.mxu0 0
      %912 = vmatprep.subr.bf16.mxu0 0
      %913 = vmatpush2.bf16.msra.mxu0 0
      %914 = vmatprep.subr.bf16.mxu0 0
      %915 = vmatpush2.bf16.msra.mxu0 0
      %916 = vmatprep.subr.bf16.mxu0 0
      %917 = vmatpush2.bf16.msra.mxu0 0
      %918 = vmatprep.subr.bf16.mxu0 0
      %919 = vmatpush2.bf16.msra.mxu0 0
      %920 = vmatprep.mubr.bf16.mxu0 0
      %921 = vmatmul.mubr.bf16.gmra.mxu0 %v886
      %v922 = vpop.f32.mrf.mxu0
      %v923 = vadd.f32 %v870, %v922
      %v924 = vpop.f32.mrf.mxu0
      %v925 = vpop.f32.mrf.mxu0
      %v926 = vadd.f32 %v870, %v925
      %v927 = vpop.f32.mrf.mxu0
      %928 = vdwg.mxu0
      %v929 = vpack.c.bf16 %v923, %v923
      %v930 = vpack.c.bf16 %v926, %v926
      %932 = vrot.lane.b32.xlu0 %v929, 96
      %v933 = vpop.permute.xlu0 %932
      %vm934 = vcmask 130048
      %v936 = vsel %vm934, %v929, 0
      %v939 = vsel %vm934, %v933, 0
      %941 = vmatprep.subr.bf16.mxu0 0
      %942 = vmatpush1.bf16.xpose.msra.mxu0 0
      %943 = vmatprep.subr.bf16.mxu0 0
      %944 = vmatpush1.bf16.xpose.msra.mxu0 0
      %945 = vmatprep.subr.bf16.mxu0 0
      %946 = vmatpush1.bf16.xpose.msra.mxu0 0
      %947 = vmatprep.subr.bf16.mxu0 0
      %948 = vmatpush1.bf16.xpose.msra.mxu0 0
      %949 = vmatprep.subr.bf16.mxu0 0
      %950 = vmatpush1.bf16.xpose.msra.mxu0 0
      %951 = vmatprep.subr.bf16.mxu0 0
      %952 = vmatpush1.bf16.xpose.msra.mxu0 0
      %953 = vmatprep.subr.bf16.mxu0 0
      %954 = vmatpush1.bf16.xpose.msra.mxu0 0
      %955 = vmatprep.subr.bf16.mxu0 0
      %956 = vmatpush1.bf16.xpose.msra.mxu0 %v939
      %957 = vmatprep.subr.bf16.mxu0 0
      %958 = vmatpush2.bf16.xpose.msra.mxu0 0
      %959 = vmatprep.subr.bf16.mxu0 0
      %960 = vmatpush2.bf16.xpose.msra.mxu0 0
      %961 = vmatprep.subr.bf16.mxu0 0
      %962 = vmatpush2.bf16.xpose.msra.mxu0 0
      %963 = vmatprep.subr.bf16.mxu0 0
      %964 = vmatpush2.bf16.xpose.msra.mxu0 0
      %965 = vmatprep.subr.bf16.mxu0 0
      %966 = vmatpush2.bf16.xpose.msra.mxu0 0
      %967 = vmatprep.subr.bf16.mxu0 0
      %968 = vmatpush2.bf16.xpose.msra.mxu0 0
      %969 = vmatprep.subr.bf16.mxu0 0
      %970 = vmatpush2.bf16.xpose.msra.mxu0 0
      %971 = vmatprep.subr.bf16.mxu0 0
      %972 = vmatpush2.bf16.xpose.msra.mxu0 0
      %973 = vmatprep.mubr.bf16.mxu0 0
      %974 = vmatmul.mubr.bf16.gmra.mxu0 %v936
      %v975 = vpop.f32.mrf.mxu0
      %v976 = vadd.f32 0.0, %v975
      %v977 = vpop.f32.mrf.mxu0
      %v978 = vpop.f32.mrf.mxu0
      %v979 = vpop.f32.mrf.mxu0
      %980 = vdwg.mxu0
      %982 = vrot.lane.b32.xlu0 %v930, 96
      %v983 = vpop.permute.xlu0 %982
      %v985 = vsel %vm934, %v930, 0
      %v988 = vsel %vm934, %v983, 0
      %990 = vmatprep.subr.bf16.mxu0 0
      %991 = vmatpush1.bf16.xpose.msra.mxu0 0
      %992 = vmatprep.subr.bf16.mxu0 0
      %993 = vmatpush1.bf16.xpose.msra.mxu0 0
      %994 = vmatprep.subr.bf16.mxu0 0
      %995 = vmatpush1.bf16.xpose.msra.mxu0 0
      %996 = vmatprep.subr.bf16.mxu0 0
      %997 = vmatpush1.bf16.xpose.msra.mxu0 0
      %998 = vmatprep.subr.bf16.mxu0 0
      %999 = vmatpush1.bf16.xpose.msra.mxu0 0
      %1000 = vmatprep.subr.bf16.mxu0 0
      %1001 = vmatpush1.bf16.xpose.msra.mxu0 0
      %1002 = vmatprep.subr.bf16.mxu0 0
      %1003 = vmatpush1.bf16.xpose.msra.mxu0 0
      %1004 = vmatprep.subr.bf16.mxu0 0
      %1005 = vmatpush1.bf16.xpose.msra.mxu0 %v988
      %1006 = vmatprep.subr.bf16.mxu0 0
      %1007 = vmatpush2.bf16.xpose.msra.mxu0 0
      %1008 = vmatprep.subr.bf16.mxu0 0
      %1009 = vmatpush2.bf16.xpose.msra.mxu0 0
      %1010 = vmatprep.subr.bf16.mxu0 0
      %1011 = vmatpush2.bf16.xpose.msra.mxu0 0
      %1012 = vmatprep.subr.bf16.mxu0 0
      %1013 = vmatpush2.bf16.xpose.msra.mxu0 0
      %1014 = vmatprep.subr.bf16.mxu0 0
      %1015 = vmatpush2.bf16.xpose.msra.mxu0 0
      %1016 = vmatprep.subr.bf16.mxu0 0
      %1017 = vmatpush2.bf16.xpose.msra.mxu0 0
      %1018 = vmatprep.subr.bf16.mxu0 0
      %1019 = vmatpush2.bf16.xpose.msra.mxu0 0
      %1020 = vmatprep.subr.bf16.mxu0 0
      %1021 = vmatpush2.bf16.xpose.msra.mxu0 0
      %1022 = vmatprep.mubr.bf16.mxu0 0
      %1023 = vmatmul.mubr.bf16.gmra.mxu0 %v985
      %v1024 = vpop.f32.mrf.mxu0
      %v1025 = vadd.f32 0.0, %v1024
      %v1026 = vpop.f32.mrf.mxu0
      %v1027 = vpop.f32.mrf.mxu0
      %v1028 = vpop.f32.mrf.mxu0
      %1029 = vdwg.mxu0
      %v1030 = vmul.f32 %v976, 0.25
      %v1031 = vmul.f32 %v1025, 0.25
      %v1034 = vlaneseq
      %v1035 = vshrl.u32 %v1034, 7
      %v1036 = vsub.s32 0, %v1035
      %v1037 = vrot.slane %v858, %v1036
      %v1038 = vlaneseq
      %v1039 = vshrl.u32 %v1038, 7
      %v1040 = vsub.s32 0, %v1039
      %v1041 = vrot.slane %v859, %v1040
      %v1044 = vadd.f32 %v1030, %v1037
      %v1045 = vadd.f32 %v1031, %v1041
      %vm1046 = vcmask 64512
      %v1047 = vsel %vm1046, %v1044, -inf
      %1048 = vmax.xlane.f32.xlu0 %v1047
      %v1049 = vpop.xlane.xlu0 %1048
      %v1050 = vsel %vm1046, %v1045, -inf
      %1051 = vmax.xlane.f32.xlu0 %v1050
      %v1052 = vpop.xlane.xlu0 %1051
      %v1053 = vsub.f32 %v1044, %v1049
      %v1054 = vsub.f32 %v1045, %v1052
      %v1055 = vmul.f32 %v1053, 1.442695
      %v1056 = vpow.pop %v1055
      %v1057 = vmul.f32 %v1054, 1.442695
      %v1058 = vpow.pop %v1057
      %v1059 = vsel %vm1046, %v1056, 0.0
      %1060 = vadd.xlane.f32.xlu0 %v1059
      %v1061 = vpop.xlane.xlu0 %1060
      %v1062 = vsel %vm1046, %v1058, 0.0
      %1063 = vadd.xlane.f32.xlu0 %v1062
      %v1064 = vpop.xlane.xlu0 %1063
      %v1065 = vrcp.pop %v1061
      %v1066 = vrcp.pop %v1064
      %v1067 = vmul.f32 %v1056, %v1065
      %v1068 = vmul.f32 %v1058, %v1066
      %v1069 = vpack.c.bf16 %v1067, %v1067
      %v1070 = vpack.c.bf16 %v1068, %v1068
      %1071 = vrot.lane.b32.xlu0 %v929, 64
      %v1072 = vpop.permute.xlu0 %1071
      %v1074 = vsel %vm1046, %v1069, 0
      %vm1076 = vcmask 1043456
      %v1078 = vsel %vm1076, %v1072, 0
      %1080 = vmatprep.subr.bf16.mxu0 0
      %1081 = vmatpush1.bf16.msra.mxu0 0
      %1082 = vmatprep.subr.bf16.mxu0 0
      %1083 = vmatpush1.bf16.msra.mxu0 0
      %1084 = vmatprep.subr.bf16.mxu0 0
      %1085 = vmatpush1.bf16.msra.mxu0 0
      %1086 = vmatprep.subr.bf16.mxu0 0
      %1087 = vmatpush1.bf16.msra.mxu0 0
      %1088 = vmatprep.subr.bf16.mxu0 0
      %1089 = vmatpush1.bf16.msra.mxu0 0
      %1090 = vmatprep.subr.bf16.mxu0 0
      %1091 = vmatpush1.bf16.msra.mxu0 0
      %1092 = vmatprep.subr.bf16.mxu0 0
      %1093 = vmatpush1.bf16.msra.mxu0 0
      %1094 = vmatprep.subr.bf16.mxu0 0
      %1095 = vmatpush1.bf16.msra.mxu0 %v1078
      %1096 = vmatprep.subr.bf16.mxu0 0
      %1097 = vmatpush2.bf16.msra.mxu0 0
      %1098 = vmatprep.subr.bf16.mxu0 0
      %1099 = vmatpush2.bf16.msra.mxu0 0
      %1100 = vmatprep.subr.bf16.mxu0 0
      %1101 = vmatpush2.bf16.msra.mxu0 0
      %1102 = vmatprep.subr.bf16.mxu0 0
      %1103 = vmatpush2.bf16.msra.mxu0 0
      %1104 = vmatprep.subr.bf16.mxu0 0
      %1105 = vmatpush2.bf16.msra.mxu0 0
      %1106 = vmatprep.subr.bf16.mxu0 0
      %1107 = vmatpush2.bf16.msra.mxu0 0
      %1108 = vmatprep.subr.bf16.mxu0 0
      %1109 = vmatpush2.bf16.msra.mxu0 0
      %1110 = vmatprep.subr.bf16.mxu0 0
      %1111 = vmatpush2.bf16.msra.mxu0 0
      %1112 = vmatprep.mubr.bf16.mxu0 0
      %1113 = vmatmul.mubr.bf16.gmra.mxu0 %v1074
      %v1114 = vpop.f32.mrf.mxu0
      %v1115 = vadd.f32 0.0, %v1114
      %v1116 = vpop.f32.mrf.mxu0
      %v1117 = vpop.f32.mrf.mxu0
      %v1118 = vpop.f32.mrf.mxu0
      %1119 = vdwg.mxu0
      %1120 = vrot.lane.b32.xlu0 %v930, 64
      %v1121 = vpop.permute.xlu0 %1120
      %v1123 = vsel %vm1046, %v1070, 0
      %v1126 = vsel %vm1076, %v1121, 0
      %1128 = vmatprep.subr.bf16.mxu0 0
      %1129 = vmatpush1.bf16.msra.mxu0 0
      %1130 = vmatprep.subr.bf16.mxu0 0
      %1131 = vmatpush1.bf16.msra.mxu0 0
      %1132 = vmatprep.subr.bf16.mxu0 0
      %1133 = vmatpush1.bf16.msra.mxu0 0
      %1134 = vmatprep.subr.bf16.mxu0 0
      %1135 = vmatpush1.bf16.msra.mxu0 0
      %1136 = vmatprep.subr.bf16.mxu0 0
      %1137 = vmatpush1.bf16.msra.mxu0 0
      %1138 = vmatprep.subr.bf16.mxu0 0
      %1139 = vmatpush1.bf16.msra.mxu0 0
      %1140 = vmatprep.subr.bf16.mxu0 0
      %1141 = vmatpush1.bf16.msra.mxu0 0
      %1142 = vmatprep.subr.bf16.mxu0 0
      %1143 = vmatpush1.bf16.msra.mxu0 %v1126
      %1144 = vmatprep.subr.bf16.mxu0 0
      %1145 = vmatpush2.bf16.msra.mxu0 0
      %1146 = vmatprep.subr.bf16.mxu0 0
      %1147 = vmatpush2.bf16.msra.mxu0 0
      %1148 = vmatprep.subr.bf16.mxu0 0
      %1149 = vmatpush2.bf16.msra.mxu0 0
      %1150 = vmatprep.subr.bf16.mxu0 0
      %1151 = vmatpush2.bf16.msra.mxu0 0
      %1152 = vmatprep.subr.bf16.mxu0 0
      %1153 = vmatpush2.bf16.msra.mxu0 0
      %1154 = vmatprep.subr.bf16.mxu0 0
      %1155 = vmatpush2.bf16.msra.mxu0 0
      %1156 = vmatprep.subr.bf16.mxu0 0
      %1157 = vmatpush2.bf16.msra.mxu0 0
      %1158 = vmatprep.subr.bf16.mxu0 0
      %1159 = vmatpush2.bf16.msra.mxu0 0
      %1160 = vmatprep.mubr.bf16.mxu0 0
      %1161 = vmatmul.mubr.bf16.gmra.mxu0 %v1123
      %v1162 = vpop.f32.mrf.mxu0
      %v1163 = vadd.f32 0.0, %v1162
      %v1164 = vpop.f32.mrf.mxu0
      %v1165 = vpop.f32.mrf.mxu0
      %v1166 = vpop.f32.mrf.mxu0
      %1167 = vdwg.mxu0
      %1168 = vrot.lane.b32.xlu0 %v929, 112
      %v1169 = vpop.permute.xlu0 %1168
      %1170 = vrot.lane.b32.xlu0 %v929, 80
      %v1171 = vpop.permute.xlu0 %1170
      %v1173 = vsel %vm934, %v1169, 0
      %v1176 = vsel %vm934, %v1171, 0
      %1178 = vmatprep.subr.bf16.mxu0 0
      %1179 = vmatpush1.bf16.xpose.msra.mxu0 0
      %1180 = vmatprep.subr.bf16.mxu0 0
      %1181 = vmatpush1.bf16.xpose.msra.mxu0 0
      %1182 = vmatprep.subr.bf16.mxu0 0
      %1183 = vmatpush1.bf16.xpose.msra.mxu0 0
      %1184 = vmatprep.subr.bf16.mxu0 0
      %1185 = vmatpush1.bf16.xpose.msra.mxu0 0
      %1186 = vmatprep.subr.bf16.mxu0 0
      %1187 = vmatpush1.bf16.xpose.msra.mxu0 0
      %1188 = vmatprep.subr.bf16.mxu0 0
      %1189 = vmatpush1.bf16.xpose.msra.mxu0 0
      %1190 = vmatprep.subr.bf16.mxu0 0
      %1191 = vmatpush1.bf16.xpose.msra.mxu0 0
      %1192 = vmatprep.subr.bf16.mxu0 0
      %1193 = vmatpush1.bf16.xpose.msra.mxu0 %v1176
      %1194 = vmatprep.subr.bf16.mxu0 0
      %1195 = vmatpush2.bf16.xpose.msra.mxu0 0
      %1196 = vmatprep.subr.bf16.mxu0 0
      %1197 = vmatpush2.bf16.xpose.msra.mxu0 0
      %1198 = vmatprep.subr.bf16.mxu0 0
      %1199 = vmatpush2.bf16.xpose.msra.mxu0 0
      %1200 = vmatprep.subr.bf16.mxu0 0
      %1201 = vmatpush2.bf16.xpose.msra.mxu0 0
      %1202 = vmatprep.subr.bf16.mxu0 0
      %1203 = vmatpush2.bf16.xpose.msra.mxu0 0
      %1204 = vmatprep.subr.bf16.mxu0 0
      %1205 = vmatpush2.bf16.xpose.msra.mxu0 0
      %1206 = vmatprep.subr.bf16.mxu0 0
      %1207 = vmatpush2.bf16.xpose.msra.mxu0 0
      %1208 = vmatprep.subr.bf16.mxu0 0
      %1209 = vmatpush2.bf16.xpose.msra.mxu0 0
      %1210 = vmatprep.mubr.bf16.mxu0 0
      %1211 = vmatmul.mubr.bf16.gmra.mxu0 %v1173
      %v1212 = vpop.f32.mrf.mxu0
      %v1213 = vadd.f32 0.0, %v1212
      %v1214 = vpop.f32.mrf.mxu0
      %v1215 = vpop.f32.mrf.mxu0
      %v1216 = vpop.f32.mrf.mxu0
      %1217 = vdwg.mxu0
      %1218 = vrot.lane.b32.xlu0 %v930, 112
      %v1219 = vpop.permute.xlu0 %1218
      %1220 = vrot.lane.b32.xlu0 %v930, 80
      %v1221 = vpop.permute.xlu0 %1220
      %v1223 = vsel %vm934, %v1219, 0
      %v1226 = vsel %vm934, %v1221, 0
      %1228 = vmatprep.subr.bf16.mxu0 0
      %1229 = vmatpush1.bf16.xpose.msra.mxu0 0
      %1230 = vmatprep.subr.bf16.mxu0 0
      %1231 = vmatpush1.bf16.xpose.msra.mxu0 0
      %1232 = vmatprep.subr.bf16.mxu0 0
      %1233 = vmatpush1.bf16.xpose.msra.mxu0 0
      %1234 = vmatprep.subr.bf16.mxu0 0
      %1235 = vmatpush1.bf16.xpose.msra.mxu0 0
      %1236 = vmatprep.subr.bf16.mxu0 0
      %1237 = vmatpush1.bf16.xpose.msra.mxu0 0
      %1238 = vmatprep.subr.bf16.mxu0 0
      %1239 = vmatpush1.bf16.xpose.msra.mxu0 0
      %1240 = vmatprep.subr.bf16.mxu0 0
      %1241 = vmatpush1.bf16.xpose.msra.mxu0 0
      %1242 = vmatprep.subr.bf16.mxu0 0
      %1243 = vmatpush1.bf16.xpose.msra.mxu0 %v1226
      %1244 = vmatprep.subr.bf16.mxu0 0
      %1245 = vmatpush2.bf16.xpose.msra.mxu0 0
      %1246 = vmatprep.subr.bf16.mxu0 0
      %1247 = vmatpush2.bf16.xpose.msra.mxu0 0
      %1248 = vmatprep.subr.bf16.mxu0 0
      %1249 = vmatpush2.bf16.xpose.msra.mxu0 0
      %1250 = vmatprep.subr.bf16.mxu0 0
      %1251 = vmatpush2.bf16.xpose.msra.mxu0 0
      %1252 = vmatprep.subr.bf16.mxu0 0
      %1253 = vmatpush2.bf16.xpose.msra.mxu0 0
      %1254 = vmatprep.subr.bf16.mxu0 0
      %1255 = vmatpush2.bf16.xpose.msra.mxu0 0
      %1256 = vmatprep.subr.bf16.mxu0 0
      %1257 = vmatpush2.bf16.xpose.msra.mxu0 0
      %1258 = vmatprep.subr.bf16.mxu0 0
      %1259 = vmatpush2.bf16.xpose.msra.mxu0 0
      %1260 = vmatprep.mubr.bf16.mxu0 0
      %1261 = vmatmul.mubr.bf16.gmra.mxu0 %v1223
      %v1262 = vpop.f32.mrf.mxu0
      %v1263 = vadd.f32 0.0, %v1262
      %v1264 = vpop.f32.mrf.mxu0
      %v1265 = vpop.f32.mrf.mxu0
      %v1266 = vpop.f32.mrf.mxu0
      %1267 = vdwg.mxu0
      %v1268 = vmul.f32 %v1213, 0.25
      %v1269 = vmul.f32 %v1263, 0.25
      %v1270 = vadd.f32 %v1268, %v1037
      %v1271 = vadd.f32 %v1269, %v1041
      %v1272 = vsel %vm1046, %v1270, -inf
      %1273 = vmax.xlane.f32.xlu0 %v1272
      %v1274 = vpop.xlane.xlu0 %1273
      %v1275 = vsel %vm1046, %v1271, -inf
      %1276 = vmax.xlane.f32.xlu0 %v1275
      %v1277 = vpop.xlane.xlu0 %1276
      %v1278 = vsub.f32 %v1270, %v1274
      %v1279 = vsub.f32 %v1271, %v1277
      %v1280 = vmul.f32 %v1278, 1.442695
      %v1281 = vpow.pop %v1280
      %v1282 = vmul.f32 %v1279, 1.442695
      %v1283 = vpow.pop %v1282
      %v1284 = vsel %vm1046, %v1281, 0.0
      %1285 = vadd.xlane.f32.xlu0 %v1284
      %v1286 = vpop.xlane.xlu0 %1285
      %v1287 = vsel %vm1046, %v1283, 0.0
      %1288 = vadd.xlane.f32.xlu0 %v1287
      %v1289 = vpop.xlane.xlu0 %1288
      %v1290 = vrcp.pop %v1286
      %v1291 = vrcp.pop %v1289
      %v1292 = vmul.f32 %v1281, %v1290
      %v1293 = vmul.f32 %v1283, %v1291
      %v1294 = vpack.c.bf16 %v1292, %v1292
      %v1295 = vpack.c.bf16 %v1293, %v1293
      %1296 = vrot.lane.b32.xlu0 %v929, 48
      %v1297 = vpop.permute.xlu0 %1296
      %v1299 = vsel %vm1046, %v1294, 0
      %v1302 = vsel %vm1076, %v1297, 0
      %1304 = vmatprep.subr.bf16.mxu0 0
      %1305 = vmatpush1.bf16.msra.mxu0 0
      %1306 = vmatprep.subr.bf16.mxu0 0
      %1307 = vmatpush1.bf16.msra.mxu0 0
      %1308 = vmatprep.subr.bf16.mxu0 0
      %1309 = vmatpush1.bf16.msra.mxu0 0
      %1310 = vmatprep.subr.bf16.mxu0 0
      %1311 = vmatpush1.bf16.msra.mxu0 0
      %1312 = vmatprep.subr.bf16.mxu0 0
      %1313 = vmatpush1.bf16.msra.mxu0 0
      %1314 = vmatprep.subr.bf16.mxu0 0
      %1315 = vmatpush1.bf16.msra.mxu0 0
      %1316 = vmatprep.subr.bf16.mxu0 0
      %1317 = vmatpush1.bf16.msra.mxu0 0
      %1318 = vmatprep.subr.bf16.mxu0 0
      %1319 = vmatpush1.bf16.msra.mxu0 %v1302
      %1320 = vmatprep.subr.bf16.mxu0 0
      %1321 = vmatpush2.bf16.msra.mxu0 0
      %1322 = vmatprep.subr.bf16.mxu0 0
      %1323 = vmatpush2.bf16.msra.mxu0 0
      %1324 = vmatprep.subr.bf16.mxu0 0
      %1325 = vmatpush2.bf16.msra.mxu0 0
      %1326 = vmatprep.subr.bf16.mxu0 0
      %1327 = vmatpush2.bf16.msra.mxu0 0
      %1328 = vmatprep.subr.bf16.mxu0 0
      %1329 = vmatpush2.bf16.msra.mxu0 0
      %1330 = vmatprep.subr.bf16.mxu0 0
      %1331 = vmatpush2.bf16.msra.mxu0 0
      %1332 = vmatprep.subr.bf16.mxu0 0
      %1333 = vmatpush2.bf16.msra.mxu0 0
      %1334 = vmatprep.subr.bf16.mxu0 0
      %1335 = vmatpush2.bf16.msra.mxu0 0
      %1336 = vmatprep.mubr.bf16.mxu0 0
      %1337 = vmatmul.mubr.bf16.gmra.mxu0 %v1299
      %v1338 = vpop.f32.mrf.mxu0
      %v1339 = vadd.f32 0.0, %v1338
      %v1340 = vpop.f32.mrf.mxu0
      %v1341 = vpop.f32.mrf.mxu0
      %v1342 = vpop.f32.mrf.mxu0
      %1343 = vdwg.mxu0
      %1344 = vrot.lane.b32.xlu0 %v930, 48
      %v1345 = vpop.permute.xlu0 %1344
      %v1347 = vsel %vm1046, %v1295, 0
      %v1350 = vsel %vm1076, %v1345, 0
      %1352 = vmatprep.subr.bf16.mxu0 0
      %1353 = vmatpush1.bf16.msra.mxu0 0
      %1354 = vmatprep.subr.bf16.mxu0 0
      %1355 = vmatpush1.bf16.msra.mxu0 0
      %1356 = vmatprep.subr.bf16.mxu0 0
      %1357 = vmatpush1.bf16.msra.mxu0 0
      %1358 = vmatprep.subr.bf16.mxu0 0
      %1359 = vmatpush1.bf16.msra.mxu0 0
      %1360 = vmatprep.subr.bf16.mxu0 0
      %1361 = vmatpush1.bf16.msra.mxu0 0
      %1362 = vmatprep.subr.bf16.mxu0 0
      %1363 = vmatpush1.bf16.msra.mxu0 0
      %1364 = vmatprep.subr.bf16.mxu0 0
      %1365 = vmatpush1.bf16.msra.mxu0 0
      %1366 = vmatprep.subr.bf16.mxu0 0
      %1367 = vmatpush1.bf16.msra.mxu0 %v1350
      %1368 = vmatprep.subr.bf16.mxu0 0
      %1369 = vmatpush2.bf16.msra.mxu0 0
      %1370 = vmatprep.subr.bf16.mxu0 0
      %1371 = vmatpush2.bf16.msra.mxu0 0
      %1372 = vmatprep.subr.bf16.mxu0 0
      %1373 = vmatpush2.bf16.msra.mxu0 0
      %1374 = vmatprep.subr.bf16.mxu0 0
      %1375 = vmatpush2.bf16.msra.mxu0 0
      %1376 = vmatprep.subr.bf16.mxu0 0
      %1377 = vmatpush2.bf16.msra.mxu0 0
      %1378 = vmatprep.subr.bf16.mxu0 0
      %1379 = vmatpush2.bf16.msra.mxu0 0
      %1380 = vmatprep.subr.bf16.mxu0 0
      %1381 = vmatpush2.bf16.msra.mxu0 0
      %1382 = vmatprep.subr.bf16.mxu0 0
      %1383 = vmatpush2.bf16.msra.mxu0 0
      %1384 = vmatprep.mubr.bf16.mxu0 0
      %1385 = vmatmul.mubr.bf16.gmra.mxu0 %v1347
      %v1386 = vpop.f32.mrf.mxu0
      %v1387 = vadd.f32 0.0, %v1386
      %v1388 = vpop.f32.mrf.mxu0
      %v1389 = vpop.f32.mrf.mxu0
      %v1390 = vpop.f32.mrf.mxu0
      %1391 = vdwg.mxu0
      %1394 = vrot.lane.b32.xlu0 %v1339, 16
      %v1395 = vpop.permute.xlu0 %1394
      %1396 = vrot.lane.b32.xlu0 %v1387, 16
      %v1397 = vpop.permute.xlu0 %1396
      %v1400 = vsel %vm934, %v1115, %v1395
      %v1401 = vsel %vm934, %v1163, %v1397
      %v1402 = vpack.c.bf16 %v1401, %v1400
      %v1403 = vld [vmem:[%s758] sm:$0xf]
      %v1404 = vld [vmem:[%s758 + $0x4] sm:$0xf]
      %v1405 = vld [vmem:[%s758 + $0x8] sm:$0xf]
      %v1406 = vld [vmem:[%s758 + $0xc] sm:$0xf]
      %v1407 = vld [vmem:[%s761] sm:$0x1]
      %v1409 = vlaneseq
      %v1410 = vshrl.u32 %v1409, 7
      %v1411 = vsub.s32 0, %v1410
      %v1412 = vrot.slane %v1407, %v1411
      %v1418 = vunpack.c.l.b16 %v1403
      %v1419 = vunpack.c.l.b16 %v1404
      %v1420 = vunpack.c.l.b16 %v1405
      %v1421 = vunpack.c.l.b16 %v1406
      %v1422 = vpack.c.b16 %v1419, %v1418
      %v1423 = vpack.c.b16 %v1421, %v1420
      %v1427 = vsel %vm884, %v1402, 0
      %1429 = vmatprep.subr.bf16.mxu0 0
      %1430 = vmatpush1.bf16.msra.mxu0 0
      %1431 = vmatprep.subr.bf16.mxu0 0
      %1432 = vmatpush1.bf16.msra.mxu0 0
      %1433 = vmatprep.subr.bf16.mxu0 0
      %1434 = vmatpush1.bf16.msra.mxu0 0
      %1435 = vmatprep.subr.bf16.mxu0 0
      %1436 = vmatpush1.bf16.msra.mxu0 0
      %1437 = vmatprep.subr.bf16.mxu0 0
      %1438 = vmatpush1.bf16.msra.mxu0 0
      %1439 = vmatprep.subr.bf16.mxu0 0
      %1440 = vmatpush1.bf16.msra.mxu0 0
      %1441 = vmatprep.subr.bf16.mxu0 0
      %1442 = vmatpush1.bf16.msra.mxu0 %v1423
      %1443 = vmatprep.subr.bf16.mxu0 0
      %1444 = vmatpush1.bf16.msra.mxu0 %v1422
      %1445 = vmatprep.subr.bf16.mxu0 0
      %1446 = vmatpush2.bf16.msra.mxu0 0
      %1447 = vmatprep.subr.bf16.mxu0 0
      %1448 = vmatpush2.bf16.msra.mxu0 0
      %1449 = vmatprep.subr.bf16.mxu0 0
      %1450 = vmatpush2.bf16.msra.mxu0 0
      %1451 = vmatprep.subr.bf16.mxu0 0
      %1452 = vmatpush2.bf16.msra.mxu0 0
      %1453 = vmatprep.subr.bf16.mxu0 0
      %1454 = vmatpush2.bf16.msra.mxu0 0
      %1455 = vmatprep.subr.bf16.mxu0 0
      %1456 = vmatpush2.bf16.msra.mxu0 0
      %1457 = vmatprep.subr.bf16.mxu0 0
      %1458 = vmatpush2.bf16.msra.mxu0 0
      %1459 = vmatprep.subr.bf16.mxu0 0
      %1460 = vmatpush2.bf16.msra.mxu0 0
      %1461 = vmatprep.mubr.bf16.mxu0 0
      %1462 = vmatmul.mubr.bf16.gmra.mxu0 %v1427
      %v1463 = vpop.f32.mrf.mxu0
      %v1464 = vadd.f32 %v1412, %v1463
      %v1465 = vpop.f32.mrf.mxu0
      %v1466 = vpop.f32.mrf.mxu0
      %v1467 = vadd.f32 %v1412, %v1466
      %v1468 = vpop.f32.mrf.mxu0
      %1469 = vdwg.mxu0
      %v1470 = vadd.f32 %v852, %v1464
      %v1471 = vadd.f32 %v853, %v1467
      %v1472 = vld [vmem:[%s764] sm:$0x1]
      %v1473 = vld [vmem:[%s767] sm:$0x1]
      %v1474 = vsel %vm884, %v1470, 0.0
      %1475 = vadd.xlane.f32.xlu0 %v1474
      %v1476 = vpop.xlane.xlu0 %1475
      %v1477 = vsel %vm884, %v1471, 0.0
      %1478 = vadd.xlane.f32.xlu0 %v1477
      %v1479 = vpop.xlane.xlu0 %1478
      %v1480 = vrcp.pop 32.0
      %v1481 = vmul.f32 %v1476, %v1480
      %v1482 = vmul.f32 %v1479, %v1480
      %v1483 = vsub.f32 %v1470, %v1481
      %v1484 = vsub.f32 %v1471, %v1482
      %v1485 = vmul.f32 %v1483, %v1483
      %v1486 = vmul.f32 %v1484, %v1484
      %v1487 = vsel %vm884, %v1485, 0.0
      %1488 = vadd.xlane.f32.xlu0 %v1487
      %v1489 = vpop.xlane.xlu0 %1488
      %v1490 = vsel %vm884, %v1486, 0.0
      %1491 = vadd.xlane.f32.xlu0 %v1490
      %v1492 = vpop.xlane.xlu0 %1491
      %v1493 = vmul.f32 %v1489, %v1480
      %v1494 = vmul.f32 %v1492, %v1480
      %v1495 = vadd.f32 %v1493, 1e-12
      %v1496 = vadd.f32 %v1494, 1e-12
      %v1497 = vrsqrt.pop %v1495
      %v1498 = vrsqrt.pop %v1496
      %v1499 = vmul.f32 %v1483, %v1497
      %v1500 = vmul.f32 %v1484, %v1498
      %v1502 = vlaneseq
      %v1503 = vshrl.u32 %v1502, 7
      %v1504 = vsub.s32 0, %v1503
      %v1505 = vrot.slane %v1472, %v1504
      %v1507 = vmul.f32 %v1499, %v1505
      %v1508 = vmul.f32 %v1500, %v1505
      %v1510 = vlaneseq
      %v1511 = vshrl.u32 %v1510, 7
      %v1512 = vsub.s32 0, %v1511
      %v1513 = vrot.slane %v1473, %v1512
      %v1515 = vadd.f32 %v1507, %v1513
      %v1516 = vadd.f32 %v1508, %v1513
      %v1517 = vpack.c.bf16 %v1516, %v1515
      %v1518 = vld [vmem:[%s772] sm:$0xf]
      %v1519 = vld [vmem:[%s772 + $0x4] sm:$0xf]
      %v1520 = vld [vmem:[%s772 + $0x8] sm:$0xf]
      %v1521 = vld [vmem:[%s772 + $0xc] sm:$0xf]
      %v1522 = vld [vmem:[%s775] sm:$0x1]
      %v1524 = vlaneseq
      %v1525 = vshrl.u32 %v1524, 7
      %v1526 = vsub.s32 0, %v1525
      %v1527 = vrot.slane %v1522, %v1526
      %v1533 = vunpack.c.l.b16 %v1518
      %v1534 = vunpack.c.l.b16 %v1519
      %v1535 = vunpack.c.l.b16 %v1520
      %v1536 = vunpack.c.l.b16 %v1521
      %v1537 = vpack.c.b16 %v1534, %v1533
      %v1538 = vpack.c.b16 %v1536, %v1535
      %v1542 = vsel %vm884, %v1517, 0
      %1544 = vmatprep.subr.bf16.mxu0 0
      %1545 = vmatpush1.bf16.msra.mxu0 0
      %1546 = vmatprep.subr.bf16.mxu0 0
      %1547 = vmatpush1.bf16.msra.mxu0 0
      %1548 = vmatprep.subr.bf16.mxu0 0
      %1549 = vmatpush1.bf16.msra.mxu0 0
      %1550 = vmatprep.subr.bf16.mxu0 0
      %1551 = vmatpush1.bf16.msra.mxu0 0
      %1552 = vmatprep.subr.bf16.mxu0 0
      %1553 = vmatpush1.bf16.msra.mxu0 0
      %1554 = vmatprep.subr.bf16.mxu0 0
      %1555 = vmatpush1.bf16.msra.mxu0 0
      %1556 = vmatprep.subr.bf16.mxu0 0
      %1557 = vmatpush1.bf16.msra.mxu0 %v1538
      %1558 = vmatprep.subr.bf16.mxu0 0
      %1559 = vmatpush1.bf16.msra.mxu0 %v1537
      %1560 = vmatprep.subr.bf16.mxu0 0
      %1561 = vmatpush2.bf16.msra.mxu0 0
      %1562 = vmatprep.subr.bf16.mxu0 0
      %1563 = vmatpush2.bf16.msra.mxu0 0
      %1564 = vmatprep.subr.bf16.mxu0 0
      %1565 = vmatpush2.bf16.msra.mxu0 0
      %1566 = vmatprep.subr.bf16.mxu0 0
      %1567 = vmatpush2.bf16.msra.mxu0 0
      %1568 = vmatprep.subr.bf16.mxu0 0
      %1569 = vmatpush2.bf16.msra.mxu0 0
      %1570 = vmatprep.subr.bf16.mxu0 0
      %1571 = vmatpush2.bf16.msra.mxu0 0
      %1572 = vmatprep.subr.bf16.mxu0 0
      %1573 = vmatpush2.bf16.msra.mxu0 0
      %1574 = vmatprep.subr.bf16.mxu0 0
      %1575 = vmatpush2.bf16.msra.mxu0 0
      %1576 = vmatprep.mubr.bf16.mxu0 0
      %1577 = vmatmul.mubr.bf16.gmra.mxu0 %v1542
      %v1578 = vpop.f32.mrf.mxu0
      %v1579 = vadd.f32 %v1527, %v1578
      %v1580 = vpop.f32.mrf.mxu0
      %v1581 = vpop.f32.mrf.mxu0
      %v1582 = vadd.f32 %v1527, %v1581
      %v1583 = vpop.f32.mrf.mxu0
      %1584 = vdwg.mxu0
      %v1585 = vmul.f32 %v1579, 0.5
      %v1586 = vmul.f32 %v1582, 0.5
      %v1587 = vmul.f32 %v1579, 0.044715
      %v1588 = vmul.f32 %v1582, 0.044715
      %v1589 = vmul.f32 %v1587, %v1579
      %v1590 = vmul.f32 %v1588, %v1582
      %v1591 = vmul.f32 %v1589, %v1579
      %v1592 = vmul.f32 %v1590, %v1582
      %v1593 = vadd.f32 %v1579, %v1591
      %v1594 = vadd.f32 %v1582, %v1592
      %v1595 = vmul.f32 %v1593, 0.7978846
      %v1596 = vmul.f32 %v1594, 0.7978846
      %v1597 = vtanh.pop %v1595
      %v1598 = vtanh.pop %v1596
      %v1599 = vadd.f32 %v1597, 1.0
      %v1600 = vadd.f32 %v1598, 1.0
      %v1601 = vmul.f32 %v1585, %v1599
      %v1602 = vmul.f32 %v1586, %v1600
      %v1603 = vpack.c.bf16 %v1602, %v1601
      %v1604 = vld [vmem:[%s780] sm:$0xf]
      %v1605 = vld [vmem:[%s780 + $0x4] sm:$0xf]
      %v1606 = vld [vmem:[%s780 + $0x8] sm:$0xf]
      %v1607 = vld [vmem:[%s780 + $0xc] sm:$0xf]
      %v1608 = vld [vmem:[%s780 + $0x10] sm:$0xf]
      %v1609 = vld [vmem:[%s780 + $0x14] sm:$0xf]
      %v1610 = vld [vmem:[%s780 + $0x18] sm:$0xf]
      %v1611 = vld [vmem:[%s780 + $0x1c] sm:$0xf]
      %v1612 = vld [vmem:[%s780 + $0x20] sm:$0xf]
      %v1613 = vld [vmem:[%s780 + $0x24] sm:$0xf]
      %v1614 = vld [vmem:[%s780 + $0x28] sm:$0xf]
      %v1615 = vld [vmem:[%s780 + $0x2c] sm:$0xf]
      %v1616 = vld [vmem:[%s780 + $0x30] sm:$0xf]
      %v1617 = vld [vmem:[%s780 + $0x34] sm:$0xf]
      %v1618 = vld [vmem:[%s780 + $0x38] sm:$0xf]
      %v1619 = vld [vmem:[%s780 + $0x3c] sm:$0xf]
      %v1620 = vld [vmem:[%s783] sm:$0x1]
      %v1622 = vlaneseq
      %v1623 = vshrl.u32 %v1622, 7
      %v1624 = vsub.s32 0, %v1623
      %v1625 = vrot.slane %v1620, %v1624
      %v1643 = vunpack.c.l.b16 %v1604
      %v1644 = vunpack.c.l.b16 %v1605
      %v1645 = vunpack.c.l.b16 %v1606
      %v1646 = vunpack.c.l.b16 %v1607
      %v1647 = vunpack.c.l.b16 %v1608
      %v1648 = vunpack.c.l.b16 %v1609
      %v1649 = vunpack.c.l.b16 %v1610
      %v1650 = vunpack.c.l.b16 %v1611
      %v1651 = vunpack.c.l.b16 %v1612
      %v1652 = vunpack.c.l.b16 %v1613
      %v1653 = vunpack.c.l.b16 %v1614
      %v1654 = vunpack.c.l.b16 %v1615
      %v1655 = vunpack.c.l.b16 %v1616
      %v1656 = vunpack.c.l.b16 %v1617
      %v1657 = vunpack.c.l.b16 %v1618
      %v1658 = vunpack.c.l.b16 %v1619
      %v1659 = vpack.c.b16 %v1644, %v1643
      %v1660 = vpack.c.b16 %v1646, %v1645
      %v1661 = vpack.c.b16 %v1648, %v1647
      %v1662 = vpack.c.b16 %v1650, %v1649
      %v1663 = vpack.c.b16 %v1652, %v1651
      %v1664 = vpack.c.b16 %v1654, %v1653
      %v1665 = vpack.c.b16 %v1656, %v1655
      %v1666 = vpack.c.b16 %v1658, %v1657
      %1675 = vmatprep.subr.bf16.mxu0 0
      %1676 = vmatpush1.bf16.msra.mxu0 %v1666
      %1677 = vmatprep.subr.bf16.mxu0 0
      %1678 = vmatpush1.bf16.msra.mxu0 %v1665
      %1679 = vmatprep.subr.bf16.mxu0 0
      %1680 = vmatpush1.bf16.msra.mxu0 %v1664
      %1681 = vmatprep.subr.bf16.mxu0 0
      %1682 = vmatpush1.bf16.msra.mxu0 %v1663
      %1683 = vmatprep.subr.bf16.mxu0 0
      %1684 = vmatpush1.bf16.msra.mxu0 %v1662
      %1685 = vmatprep.subr.bf16.mxu0 0
      %1686 = vmatpush1.bf16.msra.mxu0 %v1661
      %1687 = vmatprep.subr.bf16.mxu0 0
      %1688 = vmatpush1.bf16.msra.mxu0 %v1660
      %1689 = vmatprep.subr.bf16.mxu0 0
      %1690 = vmatpush1.bf16.msra.mxu0 %v1659
      %1691 = vmatprep.subr.bf16.mxu0 0
      %1692 = vmatpush2.bf16.msra.mxu0 0
      %1693 = vmatprep.subr.bf16.mxu0 0
      %1694 = vmatpush2.bf16.msra.mxu0 0
      %1695 = vmatprep.subr.bf16.mxu0 0
      %1696 = vmatpush2.bf16.msra.mxu0 0
      %1697 = vmatprep.subr.bf16.mxu0 0
      %1698 = vmatpush2.bf16.msra.mxu0 0
      %1699 = vmatprep.subr.bf16.mxu0 0
      %1700 = vmatpush2.bf16.msra.mxu0 0
      %1701 = vmatprep.subr.bf16.mxu0 0
      %1702 = vmatpush2.bf16.msra.mxu0 0
      %1703 = vmatprep.subr.bf16.mxu0 0
      %1704 = vmatpush2.bf16.msra.mxu0 0
      %1705 = vmatprep.subr.bf16.mxu0 0
      %1706 = vmatpush2.bf16.msra.mxu0 0
      %1707 = vmatprep.mubr.bf16.mxu0 0
      %1708 = vmatmul.mubr.bf16.gmra.mxu0 %v1603
      %v1709 = vpop.f32.mrf.mxu0
      %v1710 = vadd.f32 %v1625, %v1709
      %v1711 = vpop.f32.mrf.mxu0
      %v1712 = vpop.f32.mrf.mxu0
      %v1713 = vadd.f32 %v1625, %v1712
      %v1714 = vpop.f32.mrf.mxu0
      %1715 = vdwg.mxu0
      %v1716 = vadd.f32 %v1515, %v1710
      %v1717 = vadd.f32 %v1516, %v1713
      %v1718 = vld [vmem:[%s786] sm:$0x1]
      %v1719 = vld [vmem:[%s789] sm:$0x1]
      %v1720 = vsel %vm884, %v1716, 0.0
      %1721 = vadd.xlane.f32.xlu0 %v1720
      %v1722 = vpop.xlane.xlu0 %1721
      %v1723 = vsel %vm884, %v1717, 0.0
      %1724 = vadd.xlane.f32.xlu0 %v1723
      %v1725 = vpop.xlane.xlu0 %1724
      %v1726 = vmul.f32 %v1722, %v1480
      %v1727 = vmul.f32 %v1725, %v1480
      %v1728 = vsub.f32 %v1716, %v1726
      %v1729 = vsub.f32 %v1717, %v1727
      %v1730 = vmul.f32 %v1728, %v1728
      %v1731 = vmul.f32 %v1729, %v1729
      %v1732 = vsel %vm884, %v1730, 0.0
      %1733 = vadd.xlane.f32.xlu0 %v1732
      %v1734 = vpop.xlane.xlu0 %1733
      %v1735 = vsel %vm884, %v1731, 0.0
      %1736 = vadd.xlane.f32.xlu0 %v1735
      %v1737 = vpop.xlane.xlu0 %1736
      %v1738 = vmul.f32 %v1734, %v1480
      %v1739 = vmul.f32 %v1737, %v1480
      %v1740 = vadd.f32 %v1738, 1e-12
      %v1741 = vadd.f32 %v1739, 1e-12
      %v1742 = vrsqrt.pop %v1740
      %v1743 = vrsqrt.pop %v1741
      %v1744 = vmul.f32 %v1728, %v1742
      %v1745 = vmul.f32 %v1729, %v1743
      %v1747 = vlaneseq
      %v1748 = vshrl.u32 %v1747, 7
      %v1749 = vsub.s32 0, %v1748
      %v1750 = vrot.slane %v1718, %v1749
      %v1752 = vmul.f32 %v1744, %v1750
      %v1753 = vmul.f32 %v1745, %v1750
      %v1755 = vlaneseq
      %v1756 = vshrl.u32 %v1755, 7
      %v1757 = vsub.s32 0, %v1756
      %v1758 = vrot.slane %v1719, %v1757
      %v1760 = vadd.f32 %v1752, %v1758
      %v1761 = vadd.f32 %v1753, %v1758
      %1762 = vst.msk [vmem:[#allocation2] sm:$0xff] %vm884, %v1760
      %1763 = vst.msk [vmem:[#allocation2 + $0x8] sm:$0xff] %vm884, %v1761
      %p1764 = scmp.eq.s32.totalorder %s33, 1
      // Predicated region
      $region93: #{sccl_bert_forward.1} parent=87 // pred_check
        %p1765 = pneg %p1764
      $region94: #{sccl_bert_forward.1} parent=87 // pred_check_branch
        %1767 = sbr.rel (%p1765) target = $region96
      $region95: #{sccl_bert_forward.1} parent=87 // pred_region
        %v1768 = vld [vmem:[%s744] sm:$0xff]
        %v1769 = vld [vmem:[%s744 + $0x8] sm:$0xff]
        %1771 = vset.pattern.permute.xlu0 0
        %1772 = vperm.xlu0 %1771, %v1768
        %v1773 = vpop.permute.xlu0 %1772
        %1776 = vset.pattern.permute.xlu0 0
        %1777 = vperm.xlu0 %1776, %v1769
        %v1778 = vpop.permute.xlu0 %1777
        %v1780 = vmul.f32 %v1760, %v1773
        %v1781 = vmul.f32 %v1761, %v1778
        %v1782 = vsel %vm884, %v1780, 0.0
        %v1783 = vrot.slane %v1782, 4
        %v1784 = vadd.f32 %v1782, %v1783
        %v1785 = vrot.slane %v1784, 2
        %v1786 = vadd.f32 %v1784, %v1785
        %v1787 = vrot.slane %v1786, 1
        %v1788 = vadd.f32 %v1786, %v1787
        %v1789 = vsel %vm884, %v1781, 0.0
        %v1790 = vrot.slane %v1789, 4
        %v1791 = vadd.f32 %v1789, %v1790
        %v1792 = vrot.slane %v1791, 2
        %v1793 = vadd.f32 %v1791, %v1792
        %v1794 = vrot.slane %v1793, 1
        %v1795 = vadd.f32 %v1793, %v1794
        %vm1796 = vcmask 7168
        %v1797 = vsel %vm1796, %v1768, 0.0
        %v1798 = vrot.slane %v1797, 4
        %v1799 = vadd.f32 %v1797, %v1798
        %v1800 = vrot.slane %v1799, 2
        %v1801 = vadd.f32 %v1799, %v1800
        %v1802 = vrot.slane %v1801, 1
        %v1803 = vadd.f32 %v1801, %v1802
        %v1804 = vsel %vm1796, %v1769, 0.0
        %v1805 = vrot.slane %v1804, 4
        %v1806 = vadd.f32 %v1804, %v1805
        %v1807 = vrot.slane %v1806, 2
        %v1808 = vadd.f32 %v1806, %v1807
        %v1809 = vrot.slane %v1808, 1
        %v1810 = vadd.f32 %v1808, %v1809
        %v1811 = vmax.f32 %v1803, 1e-09
        %v1812 = vmax.f32 %v1810, 1e-09
        %1814 = vset.pattern.permute.xlu0 0
        %1815 = vperm.xlu0 %1814, %v1811
        %v1816 = vpop.permute.xlu0 %1815
        %1819 = vset.pattern.permute.xlu0 0
        %1820 = vperm.xlu0 %1819, %v1812
        %v1821 = vpop.permute.xlu0 %1820
        %v1823 = vrcp.pop %v1816
        %v1824 = vmul.f32 %v1788, %v1823
        %v1825 = vrcp.pop %v1821
        %v1826 = vmul.f32 %v1795, %v1825
        %vm1827 = vcmask 253952
        %1828 = vst.msk [vmem:[%s793] sm:$0x1] %vm1827, %v1824
        %1829 = vst.msk [vmem:[%s793 + $0x1] sm:$0x1] %vm1827, %v1826
      $region96: #{sccl_bert_forward.1} parent=87 // pred_fallthru
        _
      %s1830 = smul.u32 2, %s32
      %p1831 = scmp.lt.s32.totalorder %s1830, 3
      %s1832 = scalar_select %p1831, %s1830, 3
      %s1833 = scalar_lea.vmem %s17, %s1832
      // Predicated region
      $region97: #{sccl_bert_forward.1} parent=87 // pred_check
        %p1834 = pneg %p490
      $region98: #{sccl_bert_forward.1} parent=87 // pred_check_branch
        %1836 = sbr.rel (%p1834) target = $region100
      $region99: #{sccl_bert_forward.1} parent=87 // pred_region
        %s1837 = smul.u32 2, %s32
      $region100: #{sccl_bert_forward.1} parent=87 // pred_fallthru
        _
    $region88: #{sccl_bert_forward.1} parent=5 // pred_fallthru
      _
    %p1838 = scmp.le.s32.totalorder 2, %s23
    // Predicated region
    $region101: #{sccl_bert_forward.1} parent=5 // pred_check
      %p1839 = pneg %p1838
    $region102: #{sccl_bert_forward.1} parent=5 // pred_check_branch
      %1841 = sbr.rel (%p1839) target = $region104
    $region103: #{sccl_bert_forward.1} parent=5 // pred_region
      %s1842 = ssub.s32 %s23, 2
      // Predicated region
      $region105: #{sccl_bert_forward.1} parent=103 // pred_check
        %p1843 = pneg %p496
      $region106: #{sccl_bert_forward.1} parent=103 // pred_check_branch
        %1845 = sbr.rel (%p1843) target = $region108
      $region107: #{sccl_bert_forward.1} parent=103 // pred_region
        %s1846 = smul.u32 2, %s34
        %p1847 = scmp.lt.s32.totalorder %s1846, 3
        %s1848 = scalar_select %p1847, %s1846, 3
        %s1849 = scalar_lea.vmem %s17, %s1848
      $region108: #{sccl_bert_forward.1} parent=103 // pred_fallthru
        _
    $region104: #{sccl_bert_forward.1} parent=5 // pred_fallthru
      _
  $region6: #{sccl_bert_forward.1} parent=0 // loop_footer
    %s27 = sadd.s32 1, %s23
  $region7: #{sccl_bert_forward.1} parent=0 // loop_footer_branch
    %22 = sbr.rel target = $region3
  $region8: #{sccl_bert_forward.1} parent=0 // loop_exit
    _

</llo_original>
